<compile_context>
chip_gen: v7x
topology: tpu7x:2x2x1
jax: 0.10.0
libtpu: 0.0.40
codegen_flags: <defaults>
</compile_context>

<pallas_src>
import functools

import jax
import jax.numpy as jnp
from jax.experimental import pallas as pl
from jax.experimental.pallas import tpu as pltpu


_PARAM_ORDER = ("gamma", "beta", "wq", "wk", "wv", "wo",
                "wi", "bi", "wf", "bf", "wp")
_BF16_PARAMS = frozenset({"wq", "wk", "wv", "wo", "wi", "wf", "wp"})


# --------------------------- small layout helpers -----------------------------


def _stack_heads(x2d, num_heads, head_dim, dtype):
    """(T, H*dh) -> (H, T, dh) head-batched layout (leading-dim stack only)."""
    parts = [x2d[:, h * head_dim:(h + 1) * head_dim].astype(dtype)[None]
             for h in range(num_heads)]
    return jnp.concatenate(parts, axis=0)


def _cols_to_batch(x2d, num_heads):
    """(T, H) -> (H, T, 1)."""
    parts = [x2d[:, h:h + 1][None] for h in range(num_heads)]
    return jnp.concatenate(parts, axis=0)


def _rows_to_batch(x2d_t, num_heads):
    """(H, T) -> (H, 1, T)."""
    parts = [x2d_t[h:h + 1, :][None] for h in range(num_heads)]
    return jnp.concatenate(parts, axis=0)


# ------------------------------ Pallas kernels --------------------------------


def _xlstm_block_kernel(num_heads, head_dim, tile,
                        x_ref, gamma_ref, beta_ref,
                        wq_ref, wk_ref, wv_ref, wo_ref,
                        wi_ref, bi_ref, wf_ref, bf_ref, wp_ref,
                        out_ref, act_scr):
    """Fused xLSTMBlock: grid = (batch, layer); x_ref view is (S, D)."""
    layer = pl.program_id(1)
    n_layers = pl.num_programs(1)

    @pl.when(layer == 0)
    def _():
        act_scr[...] = x_ref[...].astype(jnp.float32)

    e = act_scr[...]                                      # (S, D) f32, carried
    seq, dim = e.shape
    H, dh = num_heads, head_dim
    n_t = (seq + tile - 1) // tile                        # static tile count

    # ---- LayerNorm (f32, VPU) ------------------------------------------------
    mu = jnp.mean(e, axis=-1, keepdims=True)
    var = jnp.mean((e - mu) ** 2, axis=-1, keepdims=True)
    xn = (e - mu) * jax.lax.rsqrt(var + 1e-5)
    xn = xn * gamma_ref[...] + beta_ref[...]
    xn_b = xn.astype(jnp.bfloat16)

    # ---- projections (bf16 MXU inputs, f32 accumulation) ----------------------
    q = jnp.dot(xn_b, wq_ref[...], preferred_element_type=jnp.float32)
    k = jnp.dot(xn_b, wk_ref[...], preferred_element_type=jnp.float32) * (dh ** -0.5)
    v = jnp.dot(xn_b, wv_ref[...], preferred_element_type=jnp.float32)
    o = jax.nn.sigmoid(
        jnp.dot(xn_b, wo_ref[...], preferred_element_type=jnp.float32))

    # ---- gate pre-activations (log input gate, log-sigmoid forget gate) ------
    log_i = (jnp.dot(xn_b, wi_ref[...], preferred_element_type=jnp.float32)
             + bi_ref[...])                               # (S, H)
    log_f = jax.nn.log_sigmoid(
        jnp.dot(xn_b, wf_ref[...], preferred_element_type=jnp.float32)
        + bf_ref[...])                                    # (S, H)

    # ---- per-tile, head-batched blocks ----------------------------------------
    q_blk, k_blk, v_blk, lq_blk, ck_blk = [], [], [], [], []
    carry = jnp.zeros((1, H), jnp.float32)                # running sum of log_f
    for ti in range(n_t):
        t0 = ti * tile
        ts = min(tile, seq - t0)
        rows = slice(t0, t0 + ts)

        q_blk.append(_stack_heads(q[rows, :], H, dh, jnp.bfloat16))
        k_blk.append(_stack_heads(k[rows, :], H, dh, jnp.bfloat16))
        v_blk.append(_stack_heads(v[rows, :], H, dh, jnp.bfloat16))

        # block-wise inclusive cumsum of log_f with a carried running sum
        lf_b = log_f[rows, :]                             # (ts, H)
        r = jax.lax.broadcasted_iota(jnp.int32, (ts, ts), 0)
        c = jax.lax.broadcasted_iota(jnp.int32, (ts, ts), 1)
        ltri = (r >= c).astype(jnp.float32)
        lfc_b = jnp.dot(ltri, lf_b, preferred_element_type=jnp.float32) + carry
        carry = carry + jnp.sum(lf_b, axis=0, keepdims=True)

        lq_blk.append(_cols_to_batch(lfc_b, H))           # (H, ts, 1)  F_t term
        ck_b = (log_i[rows, :] - lfc_b).T                 # (H, ts)  i_s - F_s
        ck_blk.append(_rows_to_batch(ck_b, H))            # (H, 1, ts)

    # ---- flash-style tiled, stabilized mLSTM scores ---------------------------
    neg_big = jnp.float32(-1e30)
    h_rows = []
    for qi in range(n_t):
        tq = min(tile, seq - qi * tile)
        m = jnp.full((H, tq, 1), -jnp.inf, jnp.float32)
        den = jnp.zeros((H, tq, 1), jnp.float32)
        acc = jnp.zeros((H, tq, dh), jnp.float32)
        for ki in range(qi + 1):                          # causal: ki <= qi only
            tk = min(tile, seq - ki * tile)
            qk = jnp.einsum("hqd,hkd->hqk", q_blk[qi], k_blk[ki],
                            preferred_element_type=jnp.float32)   # (H,tq,tk)
            exparg = lq_blk[qi] + ck_blk[ki]              # F_t - F_s + i_s
            if ki == qi:                                  # diagonal tile mask
                rr = jax.lax.broadcasted_iota(jnp.int32, (tq, tk), 0)
                cc = jax.lax.broadcasted_iota(jnp.int32, (tq, tk), 1)
                exparg = jnp.where((rr >= cc)[None], exparg, neg_big)
            m_new = jnp.maximum(m, jnp.max(exparg, axis=-1, keepdims=True))
            alpha = jnp.exp(m - m_new)
            w = jnp.exp(exparg - m_new) * qk              # stabilized scores
            den = alpha * den + jnp.sum(w, axis=-1, keepdims=True)
            acc = alpha * acc + jnp.einsum(
                "hqk,hkd->hqd", w.astype(jnp.bfloat16), v_blk[ki],
                preferred_element_type=jnp.float32)
            m = m_new
        d_fin = jnp.maximum(jnp.abs(den), jnp.exp(-m))
        h_t = acc * pl.reciprocal(d_fin, approx=True)     # (H, tq, dh)
        # merge heads back into a lane-dense (tq, D) slab
        h_rows.append(jnp.concatenate([h_t[h] for h in range(H)], axis=-1))

    h_all = h_rows[0] if n_t == 1 else jnp.concatenate(h_rows, axis=0)  # (S, D)

    # ---- output gate, output projection, per-layer residual -------------------
    proj = jnp.dot((o * h_all).astype(jnp.bfloat16), wp_ref[...],
                   preferred_element_type=jnp.float32)
    e_new = e + proj
    act_scr[...] = e_new

    @pl.when(layer == n_layers - 1)
    def _():
        # outer residual of xLSTMBlock
        out_ref[...] = (e_new + x_ref[...].astype(jnp.float32)).astype(out_ref.dtype)


def _fc_kernel(x_ref, w_ref, b_ref, o_ref):
    o_ref[...] = (jnp.dot(x_ref[...], w_ref[...],
                          preferred_element_type=jnp.float32)
                  + b_ref[...]).astype(o_ref.dtype)


# -------------------------------- wrappers -------------------------------------


def xlstm_block_forward(x, layer_params, num_heads, *, tile=256):
    """Pallas equivalent of xLSTMBlock.forward.  x: (B, S, D) float32."""
    b, s, d = x.shape
    n_layers = len(layer_params)
    head_dim = d // num_heads
    assert num_heads * head_dim == d
    tile = min(tile, s)  # 256 = MXU-native on v6e/v7x; full-extent for small S

    stacked = []
    for name in _PARAM_ORDER:
        arr = jnp.stack([p[name] for p in layer_params], axis=0)
        if name in _BF16_PARAMS:
            arr = arr.astype(jnp.bfloat16)
        stacked.append(arr)

    def param_spec(p):
        shape = p.shape[1:]
        return pl.BlockSpec(
            (None,) + shape,
            lambda bb, ll, _n=len(shape): (ll,) + (0,) * _n)

    in_specs = [pl.BlockSpec((None, s, d), lambda bb, ll: (bb, 0, 0))]
    in_specs += [param_spec(p) for p in stacked]

    kernel = functools.partial(_xlstm_block_kernel, num_heads, head_dim, tile)

    return pl.pallas_call(
        kernel,
        out_shape=jax.ShapeDtypeStruct((b, s, d), x.dtype),
        grid_spec=pltpu.PrefetchScalarGridSpec(
            num_scalar_prefetch=0,
            grid=(b, n_layers),
            in_specs=in_specs,
            out_specs=pl.BlockSpec((None, s, d), lambda bb, ll: (bb, 0, 0)),
            scratch_shapes=[pltpu.VMEM((s, d), jnp.float32)],
        ),
        compiler_params=pltpu.CompilerParams(
            dimension_semantics=("parallel", "arbitrary"),
            vmem_limit_bytes=48 * 1024 * 1024,
        ),
    )(x, *stacked)


def fc_forward(x, w, b):
    m = x.shape[0]
    vocab = w.shape[1]
    return pl.pallas_call(
        _fc_kernel,
        out_shape=jax.ShapeDtypeStruct((m, vocab), jnp.float32),
    )(x, w, b.reshape(1, vocab))


def xlstm_model_forward(tokens, params, num_heads, *, tile=256):
    """Pallas equivalent of xLSTMModel.forward (inference)."""
    # Embedding lookup: plain-JAX gather glue (tiny vs. the block kernel).
    emb = jnp.take(params["embedding"], tokens, axis=0)
    hidden = xlstm_block_forward(emb, params["layers"], num_heads, tile=tile)
    # Dropout is identity at inference.
    # TODO(synk): training-mode dropout (pltpu.prng_*) and the recurrent
    # forward_step with carried (C, n) state are not implemented.
    last = hidden[:, -1, :]
    return fc_forward(last, params["fc_w"], params["fc_b"])


# ---------------------------- pure-JAX reference --------------------------------


def _layer_ref(x, p, num_heads):
    bsz, s, d = x.shape
    dh = d // num_heads
    mu = jnp.mean(x, -1, keepdims=True)
    var = jnp.mean((x - mu) ** 2, -1, keepdims=True)
    xn = (x - mu) * jax.lax.rsqrt(var + 1e-5) * p["gamma"] + p["beta"]
    q = xn @ p["wq"]
    k = (xn @ p["wk"]) * (dh ** -0.5)
    v = xn @ p["wv"]
    o = jax.nn.sigmoid(xn @ p["wo"])
    li = xn @ p["wi"] + p["bi"]
    lf = jax.nn.log_sigmoid(xn @ p["wf"] + p["bf"])
    lfc = jnp.cumsum(lf, axis=1)
    qh = q.reshape(bsz, s, num_heads, dh).transpose(0, 2, 1, 3)
    kh = k.reshape(bsz, s, num_heads, dh).transpose(0, 2, 1, 3)
    vh = v.reshape(bsz, s, num_heads, dh).transpose(0, 2, 1, 3)
    lfc_h = lfc.transpose(0, 2, 1)
    li_h = li.transpose(0, 2, 1)
    dmat = lfc_h[:, :, :, None] - lfc_h[:, :, None, :] + li_h[:, :, None, :]
    causal = jnp.tril(jnp.ones((s, s), bool))
    decay = jnp.exp(jnp.where(causal[None, None], dmat, -jnp.inf))
    qk = jnp.einsum("bhtd,bhsd->bhts", qh, kh)
    scores = decay * qk
    num = jnp.einsum("bhts,bhsd->bhtd", scores, vh)
    den = jnp.maximum(jnp.abs(scores.sum(-1, keepdims=True)), 1.0)
    h_all = (num / den).transpose(0, 2, 1, 3).reshape(bsz, s, d)
    return x + (o * h_all) @ p["wp"]


def xlstm_block_ref(x, layer_params, num_heads):
    e = x
    for p in layer_params:
        e = _layer_ref(e, p, num_heads)
    return e + x


def xlstm_model_ref(tokens, params, num_heads):
    emb = params["embedding"][tokens]
    hidden = xlstm_block_ref(emb, params["layers"], num_heads)
    return hidden[:, -1, :] @ params["fc_w"] + params["fc_b"]


# ---------------------------------- params --------------------------------------


def init_params(key, vocab, dim, heads, m_layers):
    def w(k, shape, scale=0.05):
        arr = scale * jax.random.normal(k, shape, jnp.float32)
        # keep weights bf16-exact so the bf16-MXU kernel and the f32 reference
        # use identical weight values.
        return arr.astype(jnp.bfloat16).astype(jnp.float32)

    keys = jax.random.split(key, 4)
    layers = []
    for l in range(m_layers):
        ks = jax.random.split(jax.random.fold_in(keys[0], l), 7)
        layers.append(dict(
            gamma=jnp.ones((1, dim), jnp.float32),
            beta=jnp.zeros((1, dim), jnp.float32),
            wq=w(ks[0], (dim, dim)),
            wk=w(ks[1], (dim, dim)),
            wv=w(ks[2], (dim, dim)),
            wo=w(ks[3], (dim, dim)),
            wi=w(ks[4], (dim, heads)),
            bi=jnp.zeros((1, heads), jnp.float32),
            wf=w(ks[5], (dim, heads)),
            bf=jnp.ones((1, heads), jnp.float32),
            wp=w(ks[6], (dim, dim)),
        ))
    return dict(
        embedding=jax.random.normal(keys[1], (vocab, dim), jnp.float32),
        layers=layers,
        fc_w=w(keys[2], (dim, vocab)),
        fc_b=jnp.zeros((vocab,), jnp.float32),
    )


# ----------------------------------- main ----------------------------------------

if __name__ == "__main__":
    B, S, D = 2, 8, 32
    HEADS, M_LAYERS = 4, 2
    VOCAB = 64

    key = jax.random.PRNGKey(0)
    params = init_params(key, VOCAB, D, HEADS, M_LAYERS)
    tokens = jax.random.randint(jax.random.fold_in(key, 7), (B, S), 0, VOCAB)

    # block-level check (the fused multi-layer Pallas kernel)
    x = jnp.take(params["embedding"], tokens, axis=0)
    blk = jax.block_until_ready(xlstm_block_forward(x, params["layers"], HEADS))
    blk_ref = xlstm_block_ref(x, params["layers"], HEADS)
    assert blk.shape == (B, S, D)
    assert bool(jnp.all(jnp.isfinite(blk)))
    assert float(jnp.max(jnp.abs(blk - blk_ref))) < 2e-2, "block mismatch vs JAX ref"

    # full-model check (embedding -> block -> fc on last token)
    logits = jax.block_until_ready(xlstm_model_forward(tokens, params, HEADS))
    logits_ref = xlstm_model_ref(tokens, params, HEADS)
    assert logits.shape == (B, VOCAB)
    assert bool(jnp.all(jnp.isfinite(logits)))
    assert float(jnp.max(jnp.abs(logits - logits_ref))) < 2e-2, "logits mismatch"

    print("KERNEL_OK")
</pallas_src>

<mosaic_0001>
module attributes {stable_mosaic.version = 11 : i64} {
  func.func @_xlstm_block_kernel(%arg0: i32, %arg1: i32, %arg2: memref<1x8x32xf32, #tpu.memory_space<vmem>>, %arg3: memref<1x1x32xf32, #tpu.memory_space<vmem>>, %arg4: memref<1x1x32xf32, #tpu.memory_space<vmem>>, %arg5: memref<1x32x32xbf16, #tpu.memory_space<vmem>>, %arg6: memref<1x32x32xbf16, #tpu.memory_space<vmem>>, %arg7: memref<1x32x32xbf16, #tpu.memory_space<vmem>>, %arg8: memref<1x32x32xbf16, #tpu.memory_space<vmem>>, %arg9: memref<1x32x4xbf16, #tpu.memory_space<vmem>>, %arg10: memref<1x1x4xf32, #tpu.memory_space<vmem>>, %arg11: memref<1x32x4xbf16, #tpu.memory_space<vmem>>, %arg12: memref<1x1x4xf32, #tpu.memory_space<vmem>>, %arg13: memref<1x32x32xbf16, #tpu.memory_space<vmem>>, %arg14: memref<1x8x32xf32, #tpu.memory_space<vmem>>, %arg15: memref<8x32xf32, #tpu.memory_space<vmem>>) attributes {dimension_semantics = [#tpu.dimension_semantics<parallel>, #tpu.dimension_semantics<arbitrary>], iteration_bounds = array<i64: 2, 2>, scalar_prefetch = 0 : i64, scratch_operands = 1 : i64, tpu.core_type = #tpu.core_type<tc>, window_params = [{transform_indices = @transform_0, window_bounds = array<i64: 1, 8, 32>}, {transform_indices = @transform_1, window_bounds = array<i64: 1, 1, 32>}, {transform_indices = @transform_2, window_bounds = array<i64: 1, 1, 32>}, {transform_indices = @transform_3, window_bounds = array<i64: 1, 32, 32>}, {transform_indices = @transform_4, window_bounds = array<i64: 1, 32, 32>}, {transform_indices = @transform_5, window_bounds = array<i64: 1, 32, 32>}, {transform_indices = @transform_6, window_bounds = array<i64: 1, 32, 32>}, {transform_indices = @transform_7, window_bounds = array<i64: 1, 32, 4>}, {transform_indices = @transform_8, window_bounds = array<i64: 1, 1, 4>}, {transform_indices = @transform_9, window_bounds = array<i64: 1, 32, 4>}, {transform_indices = @transform_10, window_bounds = array<i64: 1, 1, 4>}, {transform_indices = @transform_11, window_bounds = array<i64: 1, 32, 32>}, {transform_indices = @transform_12, window_bounds = array<i64: 1, 8, 32>}]} {
    %c0_i32 = arith.constant 0 : i32
    %0 = arith.cmpi eq, %arg1, %c0_i32 : i32
    %1 = arith.extui %0 : i1 to i32
    %c0_i32_0 = arith.constant 0 : i32
    %2 = arith.cmpi ne, %1, %c0_i32_0 : i32
    scf.if %2 {
      %c0_66 = arith.constant 0 : index
      %c0_67 = arith.constant 0 : index
      %c0_68 = arith.constant 0 : index
      %210 = vector.load %arg2[%c0_66, %c0_67, %c0_68] : memref<1x8x32xf32, #tpu.memory_space<vmem>>, vector<1x8x32xf32>
      %211 = vector.shape_cast %210 : vector<1x8x32xf32> to vector<8x32xf32>
      %c0_69 = arith.constant 0 : index
      %c0_70 = arith.constant 0 : index
      %212 = vector.load %arg15[%c0_69, %c0_70] : memref<8x32xf32, #tpu.memory_space<vmem>>, vector<8x32xf32>
      tpu.vector_store %arg15[%c0_69, %c0_70], %211 {strides = array<i32>} : memref<8x32xf32, #tpu.memory_space<vmem>>, vector<8x32xf32>,
    } else {
    }
    %c0 = arith.constant 0 : index
    %c0_1 = arith.constant 0 : index
    %3 = vector.load %arg15[%c0, %c0_1] : memref<8x32xf32, #tpu.memory_space<vmem>>, vector<8x32xf32>
    %cst = arith.constant dense<0.000000e+00> : vector<8xf32>
    %4 = vector.multi_reduction <add>, %3, %cst [1] : vector<8x32xf32> to vector<8xf32>
    %5 = vector.shape_cast %4 : vector<8xf32> to vector<8x1xf32>
    %cst_2 = arith.constant 3.200000e+01 : f32
    %6 = vector.broadcast %cst_2 : f32 to vector<8x1xf32>
    %7 = arith.divf %5, %6 : vector<8x1xf32>
    %8 = vector.broadcast %7 : vector<8x1xf32> to vector<8x32xf32>
    %9 = arith.subf %3, %8 : vector<8x32xf32>
    %10 = arith.mulf %9, %9 : vector<8x32xf32>
    %cst_3 = arith.constant dense<0.000000e+00> : vector<8xf32>
    %11 = vector.multi_reduction <add>, %10, %cst_3 [1] : vector<8x32xf32> to vector<8xf32>
    %12 = vector.shape_cast %11 : vector<8xf32> to vector<8x1xf32>
    %cst_4 = arith.constant 3.200000e+01 : f32
    %13 = vector.broadcast %cst_4 : f32 to vector<8x1xf32>
    %14 = arith.divf %12, %13 : vector<8x1xf32>
    %15 = vector.broadcast %7 : vector<8x1xf32> to vector<8x32xf32>
    %16 = arith.subf %3, %15 : vector<8x32xf32>
    %cst_5 = arith.constant 9.99999974E-6 : f32
    %17 = vector.broadcast %cst_5 : f32 to vector<8x1xf32>
    %18 = arith.addf %14, %17 : vector<8x1xf32>
    %19 = math.rsqrt %18 : vector<8x1xf32>
    %20 = vector.broadcast %19 : vector<8x1xf32> to vector<8x32xf32>
    %21 = arith.mulf %16, %20 : vector<8x32xf32>
    %c0_6 = arith.constant 0 : index
    %c0_7 = arith.constant 0 : index
    %c0_8 = arith.constant 0 : index
    %22 = vector.load %arg3[%c0_6, %c0_7, %c0_8] : memref<1x1x32xf32, #tpu.memory_space<vmem>>, vector<1x1x32xf32>
    %23 = vector.shape_cast %22 : vector<1x1x32xf32> to vector<1x32xf32>
    %24 = vector.broadcast %23 : vector<1x32xf32> to vector<8x32xf32>
    %25 = arith.mulf %21, %24 : vector<8x32xf32>
    %c0_9 = arith.constant 0 : index
    %c0_10 = arith.constant 0 : index
    %c0_11 = arith.constant 0 : index
    %26 = vector.load %arg4[%c0_9, %c0_10, %c0_11] : memref<1x1x32xf32, #tpu.memory_space<vmem>>, vector<1x1x32xf32>
    %27 = vector.shape_cast %26 : vector<1x1x32xf32> to vector<1x32xf32>
    %28 = vector.broadcast %27 : vector<1x32xf32> to vector<8x32xf32>
    %29 = arith.addf %25, %28 : vector<8x32xf32>
    %30 = arith.truncf %29 : vector<8x32xf32> to vector<8x32xbf16>
    %c0_12 = arith.constant 0 : index
    %c0_13 = arith.constant 0 : index
    %c0_14 = arith.constant 0 : index
    %31 = vector.load %arg5[%c0_12, %c0_13, %c0_14] : memref<1x32x32xbf16, #tpu.memory_space<vmem>>, vector<1x32x32xbf16>
    %32 = vector.shape_cast %31 : vector<1x32x32xbf16> to vector<32x32xbf16>
    %cst_15 = arith.constant dense<0.000000e+00> : vector<8x32xf32>
    %33 = tpu.matmul %30, %32, %cst_15 {dimension_numbers = #tpu.dot_dimension_numbers<[1], [0], [0], [1], [0, 0, 1, 1], [], []>} : vector<8x32xbf16>, vector<32x32xbf16>, vector<8x32xf32> -> vector<8x32xf32>
    %c0_16 = arith.constant 0 : index
    %c0_17 = arith.constant 0 : index
    %c0_18 = arith.constant 0 : index
    %34 = vector.load %arg6[%c0_16, %c0_17, %c0_18] : memref<1x32x32xbf16, #tpu.memory_space<vmem>>, vector<1x32x32xbf16>
    %35 = vector.shape_cast %34 : vector<1x32x32xbf16> to vector<32x32xbf16>
    %cst_19 = arith.constant dense<0.000000e+00> : vector<8x32xf32>
    %36 = tpu.matmul %30, %35, %cst_19 {dimension_numbers = #tpu.dot_dimension_numbers<[1], [0], [0], [1], [0, 0, 1, 1], [], []>} : vector<8x32xbf16>, vector<32x32xbf16>, vector<8x32xf32> -> vector<8x32xf32>
    %cst_20 = arith.constant 0.353553385 : f32
    %37 = vector.broadcast %cst_20 : f32 to vector<8x32xf32>
    %38 = arith.mulf %36, %37 : vector<8x32xf32>
    %c0_21 = arith.constant 0 : index
    %c0_22 = arith.constant 0 : index
    %c0_23 = arith.constant 0 : index
    %39 = vector.load %arg7[%c0_21, %c0_22, %c0_23] : memref<1x32x32xbf16, #tpu.memory_space<vmem>>, vector<1x32x32xbf16>
    %40 = vector.shape_cast %39 : vector<1x32x32xbf16> to vector<32x32xbf16>
    %cst_24 = arith.constant dense<0.000000e+00> : vector<8x32xf32>
    %41 = tpu.matmul %30, %40, %cst_24 {dimension_numbers = #tpu.dot_dimension_numbers<[1], [0], [0], [1], [0, 0, 1, 1], [], []>} : vector<8x32xbf16>, vector<32x32xbf16>, vector<8x32xf32> -> vector<8x32xf32>
    %c0_25 = arith.constant 0 : index
    %c0_26 = arith.constant 0 : index
    %c0_27 = arith.constant 0 : index
    %42 = vector.load %arg8[%c0_25, %c0_26, %c0_27] : memref<1x32x32xbf16, #tpu.memory_space<vmem>>, vector<1x32x32xbf16>
    %43 = vector.shape_cast %42 : vector<1x32x32xbf16> to vector<32x32xbf16>
    %cst_28 = arith.constant dense<0.000000e+00> : vector<8x32xf32>
    %44 = tpu.matmul %30, %43, %cst_28 {dimension_numbers = #tpu.dot_dimension_numbers<[1], [0], [0], [1], [0, 0, 1, 1], [], []>} : vector<8x32xbf16>, vector<32x32xbf16>, vector<8x32xf32> -> vector<8x32xf32>
    %45 = arith.negf %44 : vector<8x32xf32>
    %46 = math.exp %45 : vector<8x32xf32>
    %cst_29 = arith.constant 1.000000e+00 : f32
    %47 = vector.broadcast %cst_29 : f32 to vector<8x32xf32>
    %48 = arith.addf %47, %46 : vector<8x32xf32>
    %49 = arith.divf %47, %48 : vector<8x32xf32>
    %c0_30 = arith.constant 0 : index
    %c0_31 = arith.constant 0 : index
    %c0_32 = arith.constant 0 : index
    %50 = vector.load %arg9[%c0_30, %c0_31, %c0_32] : memref<1x32x4xbf16, #tpu.memory_space<vmem>>, vector<1x32x4xbf16>
    %51 = vector.shape_cast %50 : vector<1x32x4xbf16> to vector<32x4xbf16>
    %cst_33 = arith.constant dense<0.000000e+00> : vector<8x4xf32>
    %52 = tpu.matmul %30, %51, %cst_33 {dimension_numbers = #tpu.dot_dimension_numbers<[1], [0], [0], [1], [0, 0, 1, 1], [], []>} : vector<8x32xbf16>, vector<32x4xbf16>, vector<8x4xf32> -> vector<8x4xf32>
    %c0_34 = arith.constant 0 : index
    %c0_35 = arith.constant 0 : index
    %c0_36 = arith.constant 0 : index
    %53 = vector.load %arg10[%c0_34, %c0_35, %c0_36] : memref<1x1x4xf32, #tpu.memory_space<vmem>>, vector<1x1x4xf32>
    %54 = vector.shape_cast %53 : vector<1x1x4xf32> to vector<1x4xf32>
    %55 = vector.broadcast %54 : vector<1x4xf32> to vector<8x4xf32>
    %56 = arith.addf %52, %55 : vector<8x4xf32>
    %c0_37 = arith.constant 0 : index
    %c0_38 = arith.constant 0 : index
    %c0_39 = arith.constant 0 : index
    %57 = vector.load %arg11[%c0_37, %c0_38, %c0_39] : memref<1x32x4xbf16, #tpu.memory_space<vmem>>, vector<1x32x4xbf16>
    %58 = vector.shape_cast %57 : vector<1x32x4xbf16> to vector<32x4xbf16>
    %cst_40 = arith.constant dense<0.000000e+00> : vector<8x4xf32>
    %59 = tpu.matmul %30, %58, %cst_40 {dimension_numbers = #tpu.dot_dimension_numbers<[1], [0], [0], [1], [0, 0, 1, 1], [], []>} : vector<8x32xbf16>, vector<32x4xbf16>, vector<8x4xf32> -> vector<8x4xf32>
    %c0_41 = arith.constant 0 : index
    %c0_42 = arith.constant 0 : index
    %c0_43 = arith.constant 0 : index
    %60 = vector.load %arg12[%c0_41, %c0_42, %c0_43] : memref<1x1x4xf32, #tpu.memory_space<vmem>>, vector<1x1x4xf32>
    %61 = vector.shape_cast %60 : vector<1x1x4xf32> to vector<1x4xf32>
    %62 = vector.broadcast %61 : vector<1x4xf32> to vector<8x4xf32>
    %63 = arith.addf %59, %62 : vector<8x4xf32>
    %cst_44 = arith.constant 0.000000e+00 : f32
    %64 = vector.broadcast %cst_44 : f32 to vector<8x4xf32>
    %65 = arith.subf %64, %63 : vector<8x4xf32>
    %cst_45 = arith.constant 0.000000e+00 : f32
    %66 = vector.broadcast %cst_45 : f32 to vector<8x4xf32>
    %67 = arith.maximumf %65, %66 : vector<8x4xf32>
    %68 = vector.broadcast %cst_45 : f32 to vector<8x4xf32>
    %69 = arith.subf %65, %68 : vector<8x4xf32>
    %70 = arith.cmpf one, %69, %69 : vector<8x4xf32>
    %71 = vector.broadcast %cst_45 : f32 to vector<8x4xf32>
    %72 = arith.addf %65, %71 : vector<8x4xf32>
    %73 = math.absf %69 : vector<8x4xf32>
    %cst_46 = arith.constant 0.000000e+00 : f32
    %74 = vector.broadcast %cst_46 : f32 to vector<8x4xf32>
    %75 = arith.subf %74, %73 : vector<8x4xf32>
    %76 = math.exp %75 : vector<8x4xf32>
    %77 = math.log1p %76 : vector<8x4xf32>
    %78 = arith.addf %67, %77 : vector<8x4xf32>
    %79 = arith.select %70, %72, %78 : vector<8x4xi1>, vector<8x4xf32>
    %cst_47 = arith.constant 0.000000e+00 : f32
    %80 = vector.broadcast %cst_47 : f32 to vector<8x4xf32>
    %81 = arith.subf %80, %79 : vector<8x4xf32>
    %cst_48 = arith.constant 0.000000e+00 : f32
    %82 = vector.broadcast %cst_48 : f32 to vector<1x4xf32>
    %83 = vector.extract_strided_slice %33 {offsets = [0, 0], sizes = [8, 8], strides = [1, 1]} : vector<8x32xf32> to vector<8x8xf32>
    %84 = arith.truncf %83 : vector<8x8xf32> to vector<8x8xbf16>
    %85 = vector.shape_cast %84 : vector<8x8xbf16> to vector<1x8x8xbf16>
    %86 = vector.extract_strided_slice %33 {offsets = [0, 8], sizes = [8, 8], strides = [1, 1]} : vector<8x32xf32> to vector<8x8xf32>
    %87 = arith.truncf %86 : vector<8x8xf32> to vector<8x8xbf16>
    %88 = vector.shape_cast %87 : vector<8x8xbf16> to vector<1x8x8xbf16>
    %89 = vector.extract_strided_slice %33 {offsets = [0, 16], sizes = [8, 8], strides = [1, 1]} : vector<8x32xf32> to vector<8x8xf32>
    %90 = arith.truncf %89 : vector<8x8xf32> to vector<8x8xbf16>
    %91 = vector.shape_cast %90 : vector<8x8xbf16> to vector<1x8x8xbf16>
    %92 = vector.extract_strided_slice %33 {offsets = [0, 24], sizes = [8, 8], strides = [1, 1]} : vector<8x32xf32> to vector<8x8xf32>
    %93 = arith.truncf %92 : vector<8x8xf32> to vector<8x8xbf16>
    %94 = vector.shape_cast %93 : vector<8x8xbf16> to vector<1x8x8xbf16>
    %95 = tpu.concatenate %85, %88, %91, %94 in 0 : vector<1x8x8xbf16>, vector<1x8x8xbf16>, vector<1x8x8xbf16>, vector<1x8x8xbf16> -> vector<4x8x8xbf16>
    %96 = vector.extract_strided_slice %38 {offsets = [0, 0], sizes = [8, 8], strides = [1, 1]} : vector<8x32xf32> to vector<8x8xf32>
    %97 = arith.truncf %96 : vector<8x8xf32> to vector<8x8xbf16>
    %98 = vector.shape_cast %97 : vector<8x8xbf16> to vector<1x8x8xbf16>
    %99 = vector.extract_strided_slice %38 {offsets = [0, 8], sizes = [8, 8], strides = [1, 1]} : vector<8x32xf32> to vector<8x8xf32>
    %100 = arith.truncf %99 : vector<8x8xf32> to vector<8x8xbf16>
    %101 = vector.shape_cast %100 : vector<8x8xbf16> to vector<1x8x8xbf16>
    %102 = vector.extract_strided_slice %38 {offsets = [0, 16], sizes = [8, 8], strides = [1, 1]} : vector<8x32xf32> to vector<8x8xf32>
    %103 = arith.truncf %102 : vector<8x8xf32> to vector<8x8xbf16>
    %104 = vector.shape_cast %103 : vector<8x8xbf16> to vector<1x8x8xbf16>
    %105 = vector.extract_strided_slice %38 {offsets = [0, 24], sizes = [8, 8], strides = [1, 1]} : vector<8x32xf32> to vector<8x8xf32>
    %106 = arith.truncf %105 : vector<8x8xf32> to vector<8x8xbf16>
    %107 = vector.shape_cast %106 : vector<8x8xbf16> to vector<1x8x8xbf16>
    %108 = tpu.concatenate %98, %101, %104, %107 in 0 : vector<1x8x8xbf16>, vector<1x8x8xbf16>, vector<1x8x8xbf16>, vector<1x8x8xbf16> -> vector<4x8x8xbf16>
    %109 = vector.extract_strided_slice %41 {offsets = [0, 0], sizes = [8, 8], strides = [1, 1]} : vector<8x32xf32> to vector<8x8xf32>
    %110 = arith.truncf %109 : vector<8x8xf32> to vector<8x8xbf16>
    %111 = vector.shape_cast %110 : vector<8x8xbf16> to vector<1x8x8xbf16>
    %112 = vector.extract_strided_slice %41 {offsets = [0, 8], sizes = [8, 8], strides = [1, 1]} : vector<8x32xf32> to vector<8x8xf32>
    %113 = arith.truncf %112 : vector<8x8xf32> to vector<8x8xbf16>
    %114 = vector.shape_cast %113 : vector<8x8xbf16> to vector<1x8x8xbf16>
    %115 = vector.extract_strided_slice %41 {offsets = [0, 16], sizes = [8, 8], strides = [1, 1]} : vector<8x32xf32> to vector<8x8xf32>
    %116 = arith.truncf %115 : vector<8x8xf32> to vector<8x8xbf16>
    %117 = vector.shape_cast %116 : vector<8x8xbf16> to vector<1x8x8xbf16>
    %118 = vector.extract_strided_slice %41 {offsets = [0, 24], sizes = [8, 8], strides = [1, 1]} : vector<8x32xf32> to vector<8x8xf32>
    %119 = arith.truncf %118 : vector<8x8xf32> to vector<8x8xbf16>
    %120 = vector.shape_cast %119 : vector<8x8xbf16> to vector<1x8x8xbf16>
    %121 = tpu.concatenate %111, %114, %117, %120 in 0 : vector<1x8x8xbf16>, vector<1x8x8xbf16>, vector<1x8x8xbf16>, vector<1x8x8xbf16> -> vector<4x8x8xbf16>
    %122 = tpu.iota {dimensions = array<i32: 0>} : vector<8x8xi32>
    %123 = tpu.iota {dimensions = array<i32: 1>} : vector<8x8xi32>
    %124 = arith.cmpi sge, %122, %123 : vector<8x8xi32>
    %125 = arith.extui %124 : vector<8x8xi1> to vector<8x8xi32>
    %126 = arith.sitofp %125 : vector<8x8xi32> to vector<8x8xf32>
    %cst_49 = arith.constant dense<0.000000e+00> : vector<8x4xf32>
    %127 = tpu.matmul %126, %81, %cst_49 {dimension_numbers = #tpu.dot_dimension_numbers<[1], [0], [0], [1], [0, 0, 1, 1], [], []>} : vector<8x8xf32>, vector<8x4xf32>, vector<8x4xf32> -> vector<8x4xf32>
    %128 = vector.broadcast %82 : vector<1x4xf32> to vector<8x4xf32>
    %129 = arith.addf %127, %128 : vector<8x4xf32>
    %130 = vector.extract_strided_slice %129 {offsets = [0, 0], sizes = [8, 1], strides = [1, 1]} : vector<8x4xf32> to vector<8x1xf32>
    %131 = vector.shape_cast %130 : vector<8x1xf32> to vector<1x8x1xf32>
    %132 = vector.extract_strided_slice %129 {offsets = [0, 1], sizes = [8, 1], strides = [1, 1]} : vector<8x4xf32> to vector<8x1xf32>
    %133 = vector.shape_cast %132 : vector<8x1xf32> to vector<1x8x1xf32>
    %134 = vector.extract_strided_slice %129 {offsets = [0, 2], sizes = [8, 1], strides = [1, 1]} : vector<8x4xf32> to vector<8x1xf32>
    %135 = vector.shape_cast %134 : vector<8x1xf32> to vector<1x8x1xf32>
    %136 = vector.extract_strided_slice %129 {offsets = [0, 3], sizes = [8, 1], strides = [1, 1]} : vector<8x4xf32> to vector<8x1xf32>
    %137 = vector.shape_cast %136 : vector<8x1xf32> to vector<1x8x1xf32>
    %138 = tpu.concatenate %131, %133, %135, %137 in 0 : vector<1x8x1xf32>, vector<1x8x1xf32>, vector<1x8x1xf32>, vector<1x8x1xf32> -> vector<4x8x1xf32>
    %139 = arith.subf %56, %129 : vector<8x4xf32>
    %140 = tpu.transpose %139, [1, 0] : vector<8x4xf32> -> vector<4x8xf32>
    %141 = vector.extract_strided_slice %140 {offsets = [0, 0], sizes = [1, 8], strides = [1, 1]} : vector<4x8xf32> to vector<1x8xf32>
    %142 = vector.shape_cast %141 : vector<1x8xf32> to vector<1x1x8xf32>
    %143 = vector.extract_strided_slice %140 {offsets = [1, 0], sizes = [1, 8], strides = [1, 1]} : vector<4x8xf32> to vector<1x8xf32>
    %144 = vector.shape_cast %143 : vector<1x8xf32> to vector<1x1x8xf32>
    %145 = vector.extract_strided_slice %140 {offsets = [2, 0], sizes = [1, 8], strides = [1, 1]} : vector<4x8xf32> to vector<1x8xf32>
    %146 = vector.shape_cast %145 : vector<1x8xf32> to vector<1x1x8xf32>
    %147 = vector.extract_strided_slice %140 {offsets = [3, 0], sizes = [1, 8], strides = [1, 1]} : vector<4x8xf32> to vector<1x8xf32>
    %148 = vector.shape_cast %147 : vector<1x8xf32> to vector<1x1x8xf32>
    %149 = tpu.concatenate %142, %144, %146, %148 in 0 : vector<1x1x8xf32>, vector<1x1x8xf32>, vector<1x1x8xf32>, vector<1x1x8xf32> -> vector<4x1x8xf32>
    %cst_50 = arith.constant 0xFF800000 : f32
    %150 = vector.broadcast %cst_50 : f32 to vector<4x8x1xf32>
    %cst_51 = arith.constant 0.000000e+00 : f32
    %151 = vector.broadcast %cst_51 : f32 to vector<4x8x1xf32>
    %cst_52 = arith.constant 0.000000e+00 : f32
    %152 = vector.broadcast %cst_52 : f32 to vector<4x8x8xf32>
    "tpu.trace_start"() <{level = 10 : i32, message = "hqd,hkd->hqk"}> : () -> ()
    %cst_53 = arith.constant dense<0.000000e+00> : vector<4x8x8xf32>
    %153 = tpu.matmul %95, %108, %cst_53 {dimension_numbers = #tpu.dot_dimension_numbers<[2], [2], [1], [1], [0, 0, 0, 1, 1, 1], [0], [0]>} : vector<4x8x8xbf16>, vector<4x8x8xbf16>, vector<4x8x8xf32> -> vector<4x8x8xf32>
    "tpu.trace_stop"() : () -> ()
    %154 = vector.broadcast %138 : vector<4x8x1xf32> to vector<4x8x8xf32>
    %155 = vector.broadcast %149 : vector<4x1x8xf32> to vector<4x8x8xf32>
    %156 = arith.addf %154, %155 : vector<4x8x8xf32>
    %157 = tpu.iota {dimensions = array<i32: 0>} : vector<8x8xi32>
    %158 = tpu.iota {dimensions = array<i32: 1>} : vector<8x8xi32>
    %159 = arith.cmpi sge, %157, %158 : vector<8x8xi32>
    %160 = vector.shape_cast %159 : vector<8x8xi1> to vector<1x8x8xi1>
    %cst_54 = arith.constant -1.000000e+30 : f32
    %161 = vector.shape_cast %160 : vector<1x8x8xi1> to vector<1x8x8xi1>
    %162 = vector.broadcast %161 : vector<1x8x8xi1> to vector<4x8x8xi1>
    %163 = vector.broadcast %cst_54 : f32 to vector<4x8x8xf32>
    %164 = arith.select %162, %156, %163 : vector<4x8x8xi1>, vector<4x8x8xf32>
    %cst_55 = arith.constant dense<0xFF800000> : vector<4x8xf32>
    %165 = vector.multi_reduction <maximumf>, %164, %cst_55 [2] : vector<4x8x8xf32> to vector<4x8xf32>
    %166 = vector.shape_cast %165 : vector<4x8xf32> to vector<4x8x1xf32>
    %167 = arith.maximumf %150, %166 : vector<4x8x1xf32>
    %168 = arith.subf %150, %167 : vector<4x8x1xf32>
    %169 = math.exp %168 : vector<4x8x1xf32>
    %170 = vector.broadcast %167 : vector<4x8x1xf32> to vector<4x8x8xf32>
    %171 = arith.subf %164, %170 : vector<4x8x8xf32>
    %172 = math.exp %171 : vector<4x8x8xf32>
    %173 = arith.mulf %172, %153 : vector<4x8x8xf32>
    %174 = arith.mulf %169, %151 : vector<4x8x1xf32>
    %cst_56 = arith.constant dense<0.000000e+00> : vector<4x8xf32>
    %175 = vector.multi_reduction <add>, %173, %cst_56 [2] : vector<4x8x8xf32> to vector<4x8xf32>
    %176 = vector.shape_cast %175 : vector<4x8xf32> to vector<4x8x1xf32>
    %177 = arith.addf %174, %176 : vector<4x8x1xf32>
    %178 = vector.broadcast %169 : vector<4x8x1xf32> to vector<4x8x8xf32>
    %179 = arith.mulf %178, %152 : vector<4x8x8xf32>
    %180 = arith.truncf %173 : vector<4x8x8xf32> to vector<4x8x8xbf16>
    "tpu.trace_start"() <{level = 10 : i32, message = "hqk,hkd->hqd"}> : () -> ()
    %cst_57 = arith.constant dense<0.000000e+00> : vector<4x8x8xf32>
    %181 = tpu.matmul %180, %121, %cst_57 {dimension_numbers = #tpu.dot_dimension_numbers<[2], [1], [1], [2], [0, 0, 0, 1, 1, 2], [0], [0]>} : vector<4x8x8xbf16>, vector<4x8x8xbf16>, vector<4x8x8xf32> -> vector<4x8x8xf32>
    "tpu.trace_stop"() : () -> ()
    %182 = arith.addf %179, %181 : vector<4x8x8xf32>
    %183 = math.absf %177 : vector<4x8x1xf32>
    %cst_58 = arith.constant 0.000000e+00 : f32
    %184 = vector.broadcast %cst_58 : f32 to vector<4x8x1xf32>
    %185 = arith.subf %184, %167 : vector<4x8x1xf32>
    %186 = math.exp %185 : vector<4x8x1xf32>
    %187 = arith.maximumf %183, %186 : vector<4x8x1xf32>
    %188 = tpu.reciprocal %187 {approx = true} : vector<4x8x1xf32> -> vector<4x8x1xf32>
    %189 = vector.broadcast %188 : vector<4x8x1xf32> to vector<4x8x8xf32>
    %190 = arith.mulf %182, %189 : vector<4x8x8xf32>
    %191 = vector.extract_strided_slice %190 {offsets = [0, 0, 0], sizes = [1, 8, 8], strides = [1, 1, 1]} : vector<4x8x8xf32> to vector<1x8x8xf32>
    %192 = vector.shape_cast %191 : vector<1x8x8xf32> to vector<8x8xf32>
    %193 = vector.extract_strided_slice %190 {offsets = [1, 0, 0], sizes = [1, 8, 8], strides = [1, 1, 1]} : vector<4x8x8xf32> to vector<1x8x8xf32>
    %194 = vector.shape_cast %193 : vector<1x8x8xf32> to vector<8x8xf32>
    %195 = vector.extract_strided_slice %190 {offsets = [2, 0, 0], sizes = [1, 8, 8], strides = [1, 1, 1]} : vector<4x8x8xf32> to vector<1x8x8xf32>
    %196 = vector.shape_cast %195 : vector<1x8x8xf32> to vector<8x8xf32>
    %197 = vector.extract_strided_slice %190 {offsets = [3, 0, 0], sizes = [1, 8, 8], strides = [1, 1, 1]} : vector<4x8x8xf32> to vector<1x8x8xf32>
    %198 = vector.shape_cast %197 : vector<1x8x8xf32> to vector<8x8xf32>
    %199 = tpu.concatenate %192, %194, %196, %198 in 1 : vector<8x8xf32>, vector<8x8xf32>, vector<8x8xf32>, vector<8x8xf32> -> vector<8x32xf32>
    %200 = arith.mulf %49, %199 : vector<8x32xf32>
    %201 = arith.truncf %200 : vector<8x32xf32> to vector<8x32xbf16>
    %c0_59 = arith.constant 0 : index
    %c0_60 = arith.constant 0 : index
    %c0_61 = arith.constant 0 : index
    %202 = vector.load %arg13[%c0_59, %c0_60, %c0_61] : memref<1x32x32xbf16, #tpu.memory_space<vmem>>, vector<1x32x32xbf16>
    %203 = vector.shape_cast %202 : vector<1x32x32xbf16> to vector<32x32xbf16>
    %cst_62 = arith.constant dense<0.000000e+00> : vector<8x32xf32>
    %204 = tpu.matmul %201, %203, %cst_62 {dimension_numbers = #tpu.dot_dimension_numbers<[1], [0], [0], [1], [0, 0, 1, 1], [], []>} : vector<8x32xbf16>, vector<32x32xbf16>, vector<8x32xf32> -> vector<8x32xf32>
    %205 = arith.addf %3, %204 : vector<8x32xf32>
    %c0_63 = arith.constant 0 : index
    %c0_64 = arith.constant 0 : index
    %206 = vector.load %arg15[%c0_63, %c0_64] : memref<8x32xf32, #tpu.memory_space<vmem>>, vector<8x32xf32>
    tpu.vector_store %arg15[%c0_63, %c0_64], %205 {strides = array<i32>} : memref<8x32xf32, #tpu.memory_space<vmem>>, vector<8x32xf32>,
    %c1_i32 = arith.constant 1 : i32
    %207 = arith.cmpi eq, %arg1, %c1_i32 : i32
    %208 = arith.extui %207 : i1 to i32
    %c0_i32_65 = arith.constant 0 : i32
    %209 = arith.cmpi ne, %208, %c0_i32_65 : i32
    scf.if %209 {
      %c0_66 = arith.constant 0 : index
      %c0_67 = arith.constant 0 : index
      %c0_68 = arith.constant 0 : index
      %210 = vector.load %arg2[%c0_66, %c0_67, %c0_68] : memref<1x8x32xf32, #tpu.memory_space<vmem>>, vector<1x8x32xf32>
      %211 = vector.shape_cast %210 : vector<1x8x32xf32> to vector<8x32xf32>
      %212 = arith.addf %205, %211 : vector<8x32xf32>
      %c0_69 = arith.constant 0 : index
      %c0_70 = arith.constant 0 : index
      %c0_71 = arith.constant 0 : index
      %213 = vector.load %arg14[%c0_69, %c0_70, %c0_71] : memref<1x8x32xf32, #tpu.memory_space<vmem>>, vector<1x8x32xf32>
      %214 = vector.shape_cast %213 : vector<1x8x32xf32> to vector<8x32xf32>
      %215 = vector.shape_cast %212 : vector<8x32xf32> to vector<1x8x32xf32>
      tpu.vector_store %arg14[%c0_69, %c0_70, %c0_71], %215 {strides = array<i32>} : memref<1x8x32xf32, #tpu.memory_space<vmem>>, vector<1x8x32xf32>,
    } else {
    }
    return
  }
  func.func @transform_0(%arg0: i32, %arg1: i32) -> (i32, i32, i32) {
    %c0_i32 = arith.constant 0 : i32
    %c0_i32_0 = arith.constant 0 : i32
    %c0_i32_1 = arith.constant 0 : i32
    return %arg0, %c0_i32, %c0_i32_0 : i32, i32, i32
  }
  func.func @transform_1(%arg0: i32, %arg1: i32) -> (i32, i32, i32) {
    %c0_i32 = arith.constant 0 : i32
    %c0_i32_0 = arith.constant 0 : i32
    %c0_i32_1 = arith.constant 0 : i32
    return %arg1, %c0_i32, %c0_i32_0 : i32, i32, i32
  }
  func.func @transform_2(%arg0: i32, %arg1: i32) -> (i32, i32, i32) {
    %c0_i32 = arith.constant 0 : i32
    %c0_i32_0 = arith.constant 0 : i32
    %c0_i32_1 = arith.constant 0 : i32
    return %arg1, %c0_i32, %c0_i32_0 : i32, i32, i32
  }
  func.func @transform_3(%arg0: i32, %arg1: i32) -> (i32, i32, i32) {
    %c0_i32 = arith.constant 0 : i32
    %c0_i32_0 = arith.constant 0 : i32
    %c0_i32_1 = arith.constant 0 : i32
    return %arg1, %c0_i32, %c0_i32_0 : i32, i32, i32
  }
  func.func @transform_4(%arg0: i32, %arg1: i32) -> (i32, i32, i32) {
    %c0_i32 = arith.constant 0 : i32
    %c0_i32_0 = arith.constant 0 : i32
    %c0_i32_1 = arith.constant 0 : i32
    return %arg1, %c0_i32, %c0_i32_0 : i32, i32, i32
  }
  func.func @transform_5(%arg0: i32, %arg1: i32) -> (i32, i32, i32) {
    %c0_i32 = arith.constant 0 : i32
    %c0_i32_0 = arith.constant 0 : i32
    %c0_i32_1 = arith.constant 0 : i32
    return %arg1, %c0_i32, %c0_i32_0 : i32, i32, i32
  }
  func.func @transform_6(%arg0: i32, %arg1: i32) -> (i32, i32, i32) {
    %c0_i32 = arith.constant 0 : i32
    %c0_i32_0 = arith.constant 0 : i32
    %c0_i32_1 = arith.constant 0 : i32
    return %arg1, %c0_i32, %c0_i32_0 : i32, i32, i32
  }
  func.func @transform_7(%arg0: i32, %arg1: i32) -> (i32, i32, i32) {
    %c0_i32 = arith.constant 0 : i32
    %c0_i32_0 = arith.constant 0 : i32
    %c0_i32_1 = arith.constant 0 : i32
    return %arg1, %c0_i32, %c0_i32_0 : i32, i32, i32
  }
  func.func @transform_8(%arg0: i32, %arg1: i32) -> (i32, i32, i32) {
    %c0_i32 = arith.constant 0 : i32
    %c0_i32_0 = arith.constant 0 : i32
    %c0_i32_1 = arith.constant 0 : i32
    return %arg1, %c0_i32, %c0_i32_0 : i32, i32, i32
  }
  func.func @transform_9(%arg0: i32, %arg1: i32) -> (i32, i32, i32) {
    %c0_i32 = arith.constant 0 : i32
    %c0_i32_0 = arith.constant 0 : i32
    %c0_i32_1 = arith.constant 0 : i32
    return %arg1, %c0_i32, %c0_i32_0 : i32, i32, i32
  }
  func.func @transform_10(%arg0: i32, %arg1: i32) -> (i32, i32, i32) {
    %c0_i32 = arith.constant 0 : i32
    %c0_i32_0 = arith.constant 0 : i32
    %c0_i32_1 = arith.constant 0 : i32
    return %arg1, %c0_i32, %c0_i32_0 : i32, i32, i32
  }
  func.func @transform_11(%arg0: i32, %arg1: i32) -> (i32, i32, i32) {
    %c0_i32 = arith.constant 0 : i32
    %c0_i32_0 = arith.constant 0 : i32
    %c0_i32_1 = arith.constant 0 : i32
    return %arg1, %c0_i32, %c0_i32_0 : i32, i32, i32
  }
  func.func @transform_12(%arg0: i32, %arg1: i32) -> (i32, i32, i32) {
    %c0_i32 = arith.constant 0 : i32
    %c0_i32_0 = arith.constant 0 : i32
    %c0_i32_1 = arith.constant 0 : i32
    return %arg0, %c0_i32, %c0_i32_0 : i32, i32, i32
  }
}

</mosaic_0001>

<llo_original>
// kernel: tpu_custom_call.1
$region0: #{tpu_custom_call.1}
  #allocation0 [shape = 'u32[]', space=smem, size = 0x4, offset = 0x4, fixed_abs, tag = 'smem constant byte address 0x4 - core index']
  #allocation1 [shape = 'u32[144,128]{1,0:T(1,128)}', space=vmem, size = 0x12000, scoped, tag = 'internal scratch']
  #allocation2 [shape = 'f32[8,32]{1,0:T(8,128)}', space=vmem, size = 0x1000, scoped, tag = 'scratch operand']
  %s0 = inlined_call_operand.hbm [shape: f32[2,8,32], index: 0, kind: input, shape index: {}]
  %s1 = inlined_call_operand.vmem [shape: f32[2,1,32], index: 1, kind: input, shape index: {}]
  %s2 = inlined_call_operand.hbm [shape: f32[2,1,32], index: 2, kind: input, shape index: {}]
  %s3 = inlined_call_operand.vmem [shape: bf16[2,32,32], index: 3, kind: input, shape index: {}]
  %s4 = inlined_call_operand.vmem [shape: bf16[2,32,32], index: 4, kind: input, shape index: {}]
  %s5 = inlined_call_operand.hbm [shape: bf16[2,32,32], index: 5, kind: input, shape index: {}]
  %s6 = inlined_call_operand.hbm [shape: bf16[2,32,32], index: 6, kind: input, shape index: {}]
  %s7 = inlined_call_operand.vmem [shape: bf16[2,32,4], index: 7, kind: input, shape index: {}]
  %s8 = inlined_call_operand.hbm [shape: f32[2,1,4], index: 8, kind: input, shape index: {}]
  %s9 = inlined_call_operand.vmem [shape: bf16[2,32,4], index: 9, kind: input, shape index: {}]
  %s10 = inlined_call_operand.vmem [shape: f32[2,1,4], index: 10, kind: input, shape index: {}]
  %s11 = inlined_call_operand.vmem [shape: bf16[2,32,32], index: 11, kind: input, shape index: {}]
  %s12 = inlined_call_operand.hbm [shape: f32[2,8,32], index: 12, kind: output, shape index: {}]
  %s13 = sld [smem:[#allocation0]]
  $region109: #{tpu_custom_call.1} parent=0
    _
  %s15 = ssub.s32 1, %s13
  %s16 = scalar_select 0, %s15, %s13
  $region1: #{tpu_custom_call.1} parent=0
    #allocation3 [shape = 'u8[8192]{0}', space=vmem, size = 0x2000, scoped, tag = 'input window, operand 0']
    #allocation4 [shape = 's32[2]{0}', space=sflag, size = 0x8, scoped, tag = 'scoped memory for tpu_custom_call.1']
    #allocation5 [shape = 's32[2]{0}', space=sflag, size = 0x8, scoped, tag = 'scoped memory for tpu_custom_call.1']
    #allocation6 [shape = 'u8[1024]{0}', space=vmem, size = 0x400, scoped, tag = 'input window, operand 2']
    #allocation7 [shape = 's32[2]{0}', space=sflag, size = 0x8, scoped, tag = 'scoped memory for tpu_custom_call.1']
    #allocation8 [shape = 'u8[16384]{0}', space=vmem, size = 0x4000, scoped, tag = 'input window, operand 5']
    #allocation9 [shape = 'u8[16384]{0}', space=vmem, size = 0x4000, scoped, tag = 'input window, operand 6']
    #allocation10 [shape = 's32[2]{0}', space=sflag, size = 0x8, scoped, tag = 'scoped memory for tpu_custom_call.1']
    #allocation11 [shape = 'u8[1024]{0}', space=vmem, size = 0x400, scoped, tag = 'input window, operand 8']
    #allocation12 [shape = 'u8[8192]{0}', space=vmem, size = 0x2000, scoped, tag = 'output window, operand 0']
    %17 = vsyncpa [#allocation4], 0
    %s18 = scalar_lea.sflag [#allocation4], 1
    %19 = vsyncpa %s18, 0
    %20 = vsyncpa [#allocation7], 0
    %s21 = scalar_lea.sflag [#allocation7], 1
    %22 = vsyncpa %s21, 0
    %23 = vsyncpa [#allocation10], 0
    %s24 = scalar_lea.sflag [#allocation10], 1
    %25 = vsyncpa %s24, 0
    %26 = vsyncpa [#allocation5], 0
    %s27 = scalar_lea.sflag [#allocation5], 1
    %28 = vsyncpa %s27, 0
    loop: start=0, step=1, limit=6
    $region2: #{tpu_custom_call.1} parent=1 // loop_pre_header
      _
    $region3: #{tpu_custom_call.1} parent=1 // loop_header
      %s30 = sphi 0, %s34
      %p31 = scmp.ge.s32.totalorder %s30, 6
      %s37 = sphi 0, %s49
      %s38 = sphi 0, %s45
      %s39 = sphi 0, %s37
      %s40 = sphi 0, %s38
      %s41 = sphi 0, %s39
      %s42 = sphi 0, %s40
      %s52 = sphi 0, %s54
      %s55 = sphi 0, %s52
      %s56 = sphi 0, %s55
      %s72 = sphi 0, %s56
      %s78 = sphi 0, %s80
      %s81 = sphi 0, %s78
      %s82 = sphi 0, %s81
      %s98 = sphi 0, %s82
      %s104 = sphi 0, %s106
      %s107 = sphi 0, %s104
      %s108 = sphi 0, %s107
      %s124 = sphi 0, %s108
      %s130 = sphi 0, %s132
      %s133 = sphi 0, %s130
      %s134 = sphi 0, %s133
      %s150 = sphi 0, %s134
      %s156 = sphi 0, %s158
      %s159 = sphi 0, %s156
      %s160 = sphi 0, %s159
      %s176 = sphi 0, %s160
      %s182 = sphi 0, %s184
      %s185 = sphi 0, %s182
      %s186 = sphi 0, %s185
      %s202 = sphi 0, %s186
      %s208 = sphi 0, %s210
      %s211 = sphi 0, %s208
      %s212 = sphi 0, %s211
      %s228 = sphi 0, %s212
      %s234 = sphi 0, %s236
      %s237 = sphi 0, %s234
      %s238 = sphi 0, %s237
      %s254 = sphi 0, %s238
      %s260 = sphi 0, %s262
      %s263 = sphi 0, %s260
      %s264 = sphi 0, %s263
      %s280 = sphi 0, %s264
      %s286 = sphi 0, %s288
      %s289 = sphi 0, %s286
      %s290 = sphi 0, %s289
      %s306 = sphi 0, %s290
      %s312 = sphi 0, %s314
      %s315 = sphi 0, %s312
      %s316 = sphi 0, %s315
      %s332 = sphi 0, %s316
      %s338 = sphi 0, %s340
      %s341 = sphi 0, %s338
      %s342 = sphi 0, %s341
      %s358 = sphi 0, %s342
      %s364 = sphi 0, %s366
      %s367 = sphi 0, %s364
      %s368 = sphi 0, %s367
      %s384 = sphi 0, %s368
    $region4: #{tpu_custom_call.1} parent=1 // loop_header_branch
      %33 = sbr.rel (%p31) target = $region8
    $region5: #{tpu_custom_call.1} parent=1 // loop_body
      %s35 = ssub.s32 %s30, 1
      %s36 = ssub.s32 %s30, 2
      %s43 = sadd.s32 1, %s38
      %p44 = scmp.ge.s32.totalorder %s43, 2
      %s45 = scalar_select %p44, 0, %s43
      %s46 = sadd.s32 1, %s37
      %s47 = scalar_select %p44, %s46, %s37
      %p48 = scmp.ge.s32.totalorder %s47, 2
      %s49 = scalar_select %p48, 0, %s47
      %s50 = ssub.s32 %s37, %s49
      %p51 = scmp.eq.s32.totalorder %s50, 0
      %s53 = sadd.s32 %s52, 1
      %s54 = scalar_select %p51, %s52, %s53
      %p57 = pneg %p51
      %p58 = scmp.eq.s32.totalorder %s30, 3
      %p59 = por %p57, %p58
      %p60 = scmp.ne.s32.totalorder %s52, %s55
      %p61 = scmp.eq.s32.totalorder %s30, 0
      %p62 = por %p60, %p61
      %p63 = scmp.ne.s32.totalorder %s52, %s55
      %p64 = scmp.eq.s32.totalorder %s35, 3
      %p65 = por %p63, %p64
      %p66 = scmp.ne.s32.totalorder %s55, %s56
      %p67 = scmp.eq.s32.totalorder %s35, 0
      %p68 = por %p66, %p67
      %p69 = scmp.ne.s32.totalorder %s55, %s56
      %p70 = scmp.eq.s32.totalorder %s36, 3
      %p71 = por %p69, %p70
      %p73 = scmp.ne.s32.totalorder %s56, %s72
      %p74 = scmp.eq.s32.totalorder %s36, 0
      %p75 = por %p73, %p74
      %s76 = ssub.s32 %s38, %s45
      %p77 = scmp.eq.s32.totalorder %s76, 0
      %s79 = sadd.s32 %s78, 1
      %s80 = scalar_select %p77, %s78, %s79
      %p83 = pneg %p77
      %p84 = scmp.eq.s32.totalorder %s30, 3
      %p85 = por %p83, %p84
      %p86 = scmp.ne.s32.totalorder %s78, %s81
      %p87 = scmp.eq.s32.totalorder %s30, 0
      %p88 = por %p86, %p87
      %p89 = scmp.ne.s32.totalorder %s78, %s81
      %p90 = scmp.eq.s32.totalorder %s35, 3
      %p91 = por %p89, %p90
      %p92 = scmp.ne.s32.totalorder %s81, %s82
      %p93 = scmp.eq.s32.totalorder %s35, 0
      %p94 = por %p92, %p93
      %p95 = scmp.ne.s32.totalorder %s81, %s82
      %p96 = scmp.eq.s32.totalorder %s36, 3
      %p97 = por %p95, %p96
      %p99 = scmp.ne.s32.totalorder %s82, %s98
      %p100 = scmp.eq.s32.totalorder %s36, 0
      %p101 = por %p99, %p100
      %s102 = ssub.s32 %s38, %s45
      %p103 = scmp.eq.s32.totalorder %s102, 0
      %s105 = sadd.s32 %s104, 1
      %s106 = scalar_select %p103, %s104, %s105
      %p109 = pneg %p103
      %p110 = scmp.eq.s32.totalorder %s30, 3
      %p111 = por %p109, %p110
      %p112 = scmp.ne.s32.totalorder %s104, %s107
      %p113 = scmp.eq.s32.totalorder %s30, 0
      %p114 = por %p112, %p113
      %p115 = scmp.ne.s32.totalorder %s104, %s107
      %p116 = scmp.eq.s32.totalorder %s35, 3
      %p117 = por %p115, %p116
      %p118 = scmp.ne.s32.totalorder %s107, %s108
      %p119 = scmp.eq.s32.totalorder %s35, 0
      %p120 = por %p118, %p119
      %p121 = scmp.ne.s32.totalorder %s107, %s108
      %p122 = scmp.eq.s32.totalorder %s36, 3
      %p123 = por %p121, %p122
      %p125 = scmp.ne.s32.totalorder %s108, %s124
      %p126 = scmp.eq.s32.totalorder %s36, 0
      %p127 = por %p125, %p126
      %s128 = ssub.s32 %s38, %s45
      %p129 = scmp.eq.s32.totalorder %s128, 0
      %s131 = sadd.s32 %s130, 1
      %s132 = scalar_select %p129, %s130, %s131
      %p135 = pneg %p129
      %p136 = scmp.eq.s32.totalorder %s30, 3
      %p137 = por %p135, %p136
      %p138 = scmp.ne.s32.totalorder %s130, %s133
      %p139 = scmp.eq.s32.totalorder %s30, 0
      %p140 = por %p138, %p139
      %p141 = scmp.ne.s32.totalorder %s130, %s133
      %p142 = scmp.eq.s32.totalorder %s35, 3
      %p143 = por %p141, %p142
      %p144 = scmp.ne.s32.totalorder %s133, %s134
      %p145 = scmp.eq.s32.totalorder %s35, 0
      %p146 = por %p144, %p145
      %p147 = scmp.ne.s32.totalorder %s133, %s134
      %p148 = scmp.eq.s32.totalorder %s36, 3
      %p149 = por %p147, %p148
      %p151 = scmp.ne.s32.totalorder %s134, %s150
      %p152 = scmp.eq.s32.totalorder %s36, 0
      %p153 = por %p151, %p152
      %s154 = ssub.s32 %s38, %s45
      %p155 = scmp.eq.s32.totalorder %s154, 0
      %s157 = sadd.s32 %s156, 1
      %s158 = scalar_select %p155, %s156, %s157
      %p161 = pneg %p155
      %p162 = scmp.eq.s32.totalorder %s30, 3
      %p163 = por %p161, %p162
      %p164 = scmp.ne.s32.totalorder %s156, %s159
      %p165 = scmp.eq.s32.totalorder %s30, 0
      %p166 = por %p164, %p165
      %p167 = scmp.ne.s32.totalorder %s156, %s159
      %p168 = scmp.eq.s32.totalorder %s35, 3
      %p169 = por %p167, %p168
      %p170 = scmp.ne.s32.totalorder %s159, %s160
      %p171 = scmp.eq.s32.totalorder %s35, 0
      %p172 = por %p170, %p171
      %p173 = scmp.ne.s32.totalorder %s159, %s160
      %p174 = scmp.eq.s32.totalorder %s36, 3
      %p175 = por %p173, %p174
      %p177 = scmp.ne.s32.totalorder %s160, %s176
      %p178 = scmp.eq.s32.totalorder %s36, 0
      %p179 = por %p177, %p178
      %s180 = ssub.s32 %s38, %s45
      %p181 = scmp.eq.s32.totalorder %s180, 0
      %s183 = sadd.s32 %s182, 1
      %s184 = scalar_select %p181, %s182, %s183
      %p187 = pneg %p181
      %p188 = scmp.eq.s32.totalorder %s30, 3
      %p189 = por %p187, %p188
      %p190 = scmp.ne.s32.totalorder %s182, %s185
      %p191 = scmp.eq.s32.totalorder %s30, 0
      %p192 = por %p190, %p191
      %p193 = scmp.ne.s32.totalorder %s182, %s185
      %p194 = scmp.eq.s32.totalorder %s35, 3
      %p195 = por %p193, %p194
      %p196 = scmp.ne.s32.totalorder %s185, %s186
      %p197 = scmp.eq.s32.totalorder %s35, 0
      %p198 = por %p196, %p197
      %p199 = scmp.ne.s32.totalorder %s185, %s186
      %p200 = scmp.eq.s32.totalorder %s36, 3
      %p201 = por %p199, %p200
      %p203 = scmp.ne.s32.totalorder %s186, %s202
      %p204 = scmp.eq.s32.totalorder %s36, 0
      %p205 = por %p203, %p204
      %s206 = ssub.s32 %s38, %s45
      %p207 = scmp.eq.s32.totalorder %s206, 0
      %s209 = sadd.s32 %s208, 1
      %s210 = scalar_select %p207, %s208, %s209
      %p213 = pneg %p207
      %p214 = scmp.eq.s32.totalorder %s30, 3
      %p215 = por %p213, %p214
      %p216 = scmp.ne.s32.totalorder %s208, %s211
      %p217 = scmp.eq.s32.totalorder %s30, 0
      %p218 = por %p216, %p217
      %p219 = scmp.ne.s32.totalorder %s208, %s211
      %p220 = scmp.eq.s32.totalorder %s35, 3
      %p221 = por %p219, %p220
      %p222 = scmp.ne.s32.totalorder %s211, %s212
      %p223 = scmp.eq.s32.totalorder %s35, 0
      %p224 = por %p222, %p223
      %p225 = scmp.ne.s32.totalorder %s211, %s212
      %p226 = scmp.eq.s32.totalorder %s36, 3
      %p227 = por %p225, %p226
      %p229 = scmp.ne.s32.totalorder %s212, %s228
      %p230 = scmp.eq.s32.totalorder %s36, 0
      %p231 = por %p229, %p230
      %s232 = ssub.s32 %s38, %s45
      %p233 = scmp.eq.s32.totalorder %s232, 0
      %s235 = sadd.s32 %s234, 1
      %s236 = scalar_select %p233, %s234, %s235
      %p239 = pneg %p233
      %p240 = scmp.eq.s32.totalorder %s30, 3
      %p241 = por %p239, %p240
      %p242 = scmp.ne.s32.totalorder %s234, %s237
      %p243 = scmp.eq.s32.totalorder %s30, 0
      %p244 = por %p242, %p243
      %p245 = scmp.ne.s32.totalorder %s234, %s237
      %p246 = scmp.eq.s32.totalorder %s35, 3
      %p247 = por %p245, %p246
      %p248 = scmp.ne.s32.totalorder %s237, %s238
      %p249 = scmp.eq.s32.totalorder %s35, 0
      %p250 = por %p248, %p249
      %p251 = scmp.ne.s32.totalorder %s237, %s238
      %p252 = scmp.eq.s32.totalorder %s36, 3
      %p253 = por %p251, %p252
      %p255 = scmp.ne.s32.totalorder %s238, %s254
      %p256 = scmp.eq.s32.totalorder %s36, 0
      %p257 = por %p255, %p256
      %s258 = ssub.s32 %s38, %s45
      %p259 = scmp.eq.s32.totalorder %s258, 0
      %s261 = sadd.s32 %s260, 1
      %s262 = scalar_select %p259, %s260, %s261
      %p265 = pneg %p259
      %p266 = scmp.eq.s32.totalorder %s30, 3
      %p267 = por %p265, %p266
      %p268 = scmp.ne.s32.totalorder %s260, %s263
      %p269 = scmp.eq.s32.totalorder %s30, 0
      %p270 = por %p268, %p269
      %p271 = scmp.ne.s32.totalorder %s260, %s263
      %p272 = scmp.eq.s32.totalorder %s35, 3
      %p273 = por %p271, %p272
      %p274 = scmp.ne.s32.totalorder %s263, %s264
      %p275 = scmp.eq.s32.totalorder %s35, 0
      %p276 = por %p274, %p275
      %p277 = scmp.ne.s32.totalorder %s263, %s264
      %p278 = scmp.eq.s32.totalorder %s36, 3
      %p279 = por %p277, %p278
      %p281 = scmp.ne.s32.totalorder %s264, %s280
      %p282 = scmp.eq.s32.totalorder %s36, 0
      %p283 = por %p281, %p282
      %s284 = ssub.s32 %s38, %s45
      %p285 = scmp.eq.s32.totalorder %s284, 0
      %s287 = sadd.s32 %s286, 1
      %s288 = scalar_select %p285, %s286, %s287
      %p291 = pneg %p285
      %p292 = scmp.eq.s32.totalorder %s30, 3
      %p293 = por %p291, %p292
      %p294 = scmp.ne.s32.totalorder %s286, %s289
      %p295 = scmp.eq.s32.totalorder %s30, 0
      %p296 = por %p294, %p295
      %p297 = scmp.ne.s32.totalorder %s286, %s289
      %p298 = scmp.eq.s32.totalorder %s35, 3
      %p299 = por %p297, %p298
      %p300 = scmp.ne.s32.totalorder %s289, %s290
      %p301 = scmp.eq.s32.totalorder %s35, 0
      %p302 = por %p300, %p301
      %p303 = scmp.ne.s32.totalorder %s289, %s290
      %p304 = scmp.eq.s32.totalorder %s36, 3
      %p305 = por %p303, %p304
      %p307 = scmp.ne.s32.totalorder %s290, %s306
      %p308 = scmp.eq.s32.totalorder %s36, 0
      %p309 = por %p307, %p308
      %s310 = ssub.s32 %s38, %s45
      %p311 = scmp.eq.s32.totalorder %s310, 0
      %s313 = sadd.s32 %s312, 1
      %s314 = scalar_select %p311, %s312, %s313
      %p317 = pneg %p311
      %p318 = scmp.eq.s32.totalorder %s30, 3
      %p319 = por %p317, %p318
      %p320 = scmp.ne.s32.totalorder %s312, %s315
      %p321 = scmp.eq.s32.totalorder %s30, 0
      %p322 = por %p320, %p321
      %p323 = scmp.ne.s32.totalorder %s312, %s315
      %p324 = scmp.eq.s32.totalorder %s35, 3
      %p325 = por %p323, %p324
      %p326 = scmp.ne.s32.totalorder %s315, %s316
      %p327 = scmp.eq.s32.totalorder %s35, 0
      %p328 = por %p326, %p327
      %p329 = scmp.ne.s32.totalorder %s315, %s316
      %p330 = scmp.eq.s32.totalorder %s36, 3
      %p331 = por %p329, %p330
      %p333 = scmp.ne.s32.totalorder %s316, %s332
      %p334 = scmp.eq.s32.totalorder %s36, 0
      %p335 = por %p333, %p334
      %s336 = ssub.s32 %s38, %s45
      %p337 = scmp.eq.s32.totalorder %s336, 0
      %s339 = sadd.s32 %s338, 1
      %s340 = scalar_select %p337, %s338, %s339
      %p343 = pneg %p337
      %p344 = scmp.eq.s32.totalorder %s30, 3
      %p345 = por %p343, %p344
      %p346 = scmp.ne.s32.totalorder %s338, %s341
      %p347 = scmp.eq.s32.totalorder %s30, 0
      %p348 = por %p346, %p347
      %p349 = scmp.ne.s32.totalorder %s338, %s341
      %p350 = scmp.eq.s32.totalorder %s35, 3
      %p351 = por %p349, %p350
      %p352 = scmp.ne.s32.totalorder %s341, %s342
      %p353 = scmp.eq.s32.totalorder %s35, 0
      %p354 = por %p352, %p353
      %p355 = scmp.ne.s32.totalorder %s341, %s342
      %p356 = scmp.eq.s32.totalorder %s36, 3
      %p357 = por %p355, %p356
      %p359 = scmp.ne.s32.totalorder %s342, %s358
      %p360 = scmp.eq.s32.totalorder %s36, 0
      %p361 = por %p359, %p360
      %s362 = ssub.s32 %s37, %s49
      %p363 = scmp.eq.s32.totalorder %s362, 0
      %s365 = sadd.s32 %s364, 1
      %s366 = scalar_select %p363, %s364, %s365
      %p369 = pneg %p363
      %p370 = scmp.eq.s32.totalorder %s30, 3
      %p371 = por %p369, %p370
      %p372 = scmp.ne.s32.totalorder %s364, %s367
      %p373 = scmp.eq.s32.totalorder %s30, 0
      %p374 = por %p372, %p373
      %p375 = scmp.ne.s32.totalorder %s364, %s367
      %p376 = scmp.eq.s32.totalorder %s35, 3
      %p377 = por %p375, %p376
      %p378 = scmp.ne.s32.totalorder %s367, %s368
      %p379 = scmp.eq.s32.totalorder %s35, 0
      %p380 = por %p378, %p379
      %p381 = scmp.ne.s32.totalorder %s367, %s368
      %p382 = scmp.eq.s32.totalorder %s36, 3
      %p383 = por %p381, %p382
      %p385 = scmp.ne.s32.totalorder %s368, %s384
      %p386 = scmp.eq.s32.totalorder %s36, 0
      %p387 = por %p385, %p386
      %p388 = scmp.le.s32.totalorder 1, %s30
      %p389 = scmp.lt.s32.totalorder %s30, 5
      %p390 = pnand %p388, %p389
      %p391 = pneg %p390
      // Predicated region
      $region9: #{tpu_custom_call.1} parent=5 // pred_check
        _
      $region10: #{tpu_custom_call.1} parent=5 // pred_check_branch
        %393 = sbr.rel (%p390) target = $region12
      $region11: #{tpu_custom_call.1} parent=5 // pred_region
        %s394 = ssub.s32 %s30, 1
      $region12: #{tpu_custom_call.1} parent=5 // pred_fallthru
        _
      %p395 = scmp.lt.s32.totalorder %s30, 4
      // Predicated region
      $region13: #{tpu_custom_call.1} parent=5 // pred_check
        %p396 = pneg %p395
      $region14: #{tpu_custom_call.1} parent=5 // pred_check_branch
        %398 = sbr.rel (%p396) target = $region16
      $region15: #{tpu_custom_call.1} parent=5 // pred_region
        // Predicated region
        $region17: #{tpu_custom_call.1} parent=15 // pred_check
          %p399 = pneg %p62
        $region18: #{tpu_custom_call.1} parent=15 // pred_check_branch
          %401 = sbr.rel (%p399) target = $region20
        $region19: #{tpu_custom_call.1} parent=15 // pred_region
          %s402 = sand.u32 %s52, 1
          %s403 = scalar_lea.sflag [#allocation4], %s402
          %s404 = sand.u32 %s52, 1
          %s405 = smul.addr %s404, 8
          %s406 = scalar_lea.vmem [#allocation3], %s405
          %s408 = ssub.s32 128, 128
          %409 = vsyncadd %s403, %s408
          %s410 = smul.addr %s37, 128
          %s411 = scalar_lea.hbm %s0, %s410
          %s413 = sshll.u32 %s406, 4
          %s414 = int_to_ptr.vmem [resolvable:$true] %s413
          %416 = dma.hbm_to_vmem [thread:$0]  %s411, 128, %s414, %s403
        $region20: #{tpu_custom_call.1} parent=15 // pred_fallthru
          _
        // Predicated region
        $region21: #{tpu_custom_call.1} parent=15 // pred_check
          %p417 = pneg %p88
        $region22: #{tpu_custom_call.1} parent=15 // pred_check_branch
          %419 = sbr.rel (%p417) target = $region24
        $region23: #{tpu_custom_call.1} parent=15 // pred_region
          %p420 = scmp.lt.s32.totalorder %s38, 1
          %s421 = scalar_select %p420, %s38, 1
          %s422 = scalar_lea.vmem %s1, %s421
        $region24: #{tpu_custom_call.1} parent=15 // pred_fallthru
          _
        // Predicated region
        $region25: #{tpu_custom_call.1} parent=15 // pred_check
          %p423 = pneg %p114
        $region26: #{tpu_custom_call.1} parent=15 // pred_check_branch
          %425 = sbr.rel (%p423) target = $region28
        $region27: #{tpu_custom_call.1} parent=15 // pred_region
          %s426 = sand.u32 %s30, 1
          %s427 = scalar_lea.sflag [#allocation7], %s426
          %s428 = sand.u32 %s104, 1
          %s429 = scalar_lea.vmem [#allocation6], %s428
          %s431 = ssub.s32 16, 16
          %432 = vsyncadd %s427, %s431
          %s433 = smul.addr %s38, 16
          %s434 = scalar_lea.hbm %s2, %s433
          %s436 = sshll.u32 %s429, 4
          %s437 = int_to_ptr.vmem [resolvable:$true] %s436
          %439 = dma.hbm_to_vmem [thread:$0]  %s434, 16, %s437, %s427
        $region28: #{tpu_custom_call.1} parent=15 // pred_fallthru
          _
        // Predicated region
        $region29: #{tpu_custom_call.1} parent=15 // pred_check
          %p440 = pneg %p140
        $region30: #{tpu_custom_call.1} parent=15 // pred_check_branch
          %442 = sbr.rel (%p440) target = $region32
        $region31: #{tpu_custom_call.1} parent=15 // pred_region
          %p443 = scmp.lt.s32.totalorder %s38, 1
          %s444 = scalar_select %p443, %s38, 1
          %s445 = smul.addr %s444, 4
          %s446 = smul.addr %s445, 4
          %s447 = scalar_lea.vmem %s3, %s446
        $region32: #{tpu_custom_call.1} parent=15 // pred_fallthru
          _
        // Predicated region
        $region33: #{tpu_custom_call.1} parent=15 // pred_check
          %p448 = pneg %p166
        $region34: #{tpu_custom_call.1} parent=15 // pred_check_branch
          %450 = sbr.rel (%p448) target = $region36
        $region35: #{tpu_custom_call.1} parent=15 // pred_region
          %p451 = scmp.lt.s32.totalorder %s38, 1
          %s452 = scalar_select %p451, %s38, 1
          %s453 = smul.addr %s452, 4
          %s454 = smul.addr %s453, 4
          %s455 = scalar_lea.vmem %s4, %s454
        $region36: #{tpu_custom_call.1} parent=15 // pred_fallthru
          _
        // Predicated region
        $region37: #{tpu_custom_call.1} parent=15 // pred_check
          %p456 = pneg %p192
        $region38: #{tpu_custom_call.1} parent=15 // pred_check_branch
          %458 = sbr.rel (%p456) target = $region40
        $region39: #{tpu_custom_call.1} parent=15 // pred_region
          %s459 = sand.u32 %s30, 1
          %s460 = scalar_lea.sflag [#allocation7], %s459
          %s461 = sand.u32 %s182, 1
          %s462 = smul.addr %s461, 16
          %s463 = scalar_lea.vmem [#allocation8], %s462
          %s465 = ssub.s32 256, 256
          %466 = vsyncadd %s460, %s465
          %s467 = smul.addr %s38, 4
          %s468 = smul.addr %s467, 64
          %s469 = scalar_lea.hbm %s5, %s468
          %s470 = sshll.u32 %s463, 4
          %s471 = int_to_ptr.vmem [resolvable:$true] %s470
          %476 = dma.hbm_to_vmem [thread:$0]  %s469, 256, %s471, %s460, 64, 64, 4
        $region40: #{tpu_custom_call.1} parent=15 // pred_fallthru
          _
        // Predicated region
        $region41: #{tpu_custom_call.1} parent=15 // pred_check
          %p477 = pneg %p218
        $region42: #{tpu_custom_call.1} parent=15 // pred_check_branch
          %479 = sbr.rel (%p477) target = $region44
        $region43: #{tpu_custom_call.1} parent=15 // pred_region
          %s480 = sand.u32 %s30, 1
          %s481 = scalar_lea.sflag [#allocation10], %s480
          %s482 = sand.u32 %s208, 1
          %s483 = smul.addr %s482, 16
          %s484 = scalar_lea.vmem [#allocation9], %s483
          %s486 = ssub.s32 256, 256
          %487 = vsyncadd %s481, %s486
          %s488 = smul.addr %s38, 4
          %s489 = smul.addr %s488, 64
          %s490 = scalar_lea.hbm %s6, %s489
          %s491 = sshll.u32 %s484, 4
          %s492 = int_to_ptr.vmem [resolvable:$true] %s491
          %497 = dma.hbm_to_vmem [thread:$0]  %s490, 256, %s492, %s481, 64, 64, 4
        $region44: #{tpu_custom_call.1} parent=15 // pred_fallthru
          _
        // Predicated region
        $region45: #{tpu_custom_call.1} parent=15 // pred_check
          %p498 = pneg %p244
        $region46: #{tpu_custom_call.1} parent=15 // pred_check_branch
          %500 = sbr.rel (%p498) target = $region48
        $region47: #{tpu_custom_call.1} parent=15 // pred_region
          %p501 = scmp.lt.s32.totalorder %s38, 1
          %s502 = scalar_select %p501, %s38, 1
          %s503 = smul.addr %s502, 4
          %s504 = smul.addr %s503, 4
          %s505 = scalar_lea.vmem %s7, %s504
        $region48: #{tpu_custom_call.1} parent=15 // pred_fallthru
          _
        // Predicated region
        $region49: #{tpu_custom_call.1} parent=15 // pred_check
          %p506 = pneg %p270
        $region50: #{tpu_custom_call.1} parent=15 // pred_check_branch
          %508 = sbr.rel (%p506) target = $region52
        $region51: #{tpu_custom_call.1} parent=15 // pred_region
          %s509 = sand.u32 %s30, 1
          %s510 = scalar_lea.sflag [#allocation10], %s509
          %s511 = sand.u32 %s260, 1
          %s512 = scalar_lea.vmem [#allocation11], %s511
          %s514 = ssub.s32 16, 16
          %515 = vsyncadd %s510, %s514
          %s516 = smul.addr %s38, 16
          %s517 = scalar_lea.hbm %s8, %s516
          %s519 = sshll.u32 %s512, 4
          %s520 = int_to_ptr.vmem [resolvable:$true] %s519
          %522 = dma.hbm_to_vmem [thread:$0]  %s517, 16, %s520, %s510
        $region52: #{tpu_custom_call.1} parent=15 // pred_fallthru
          _
        // Predicated region
        $region53: #{tpu_custom_call.1} parent=15 // pred_check
          %p523 = pneg %p296
        $region54: #{tpu_custom_call.1} parent=15 // pred_check_branch
          %525 = sbr.rel (%p523) target = $region56
        $region55: #{tpu_custom_call.1} parent=15 // pred_region
          %p526 = scmp.lt.s32.totalorder %s38, 1
          %s527 = scalar_select %p526, %s38, 1
          %s528 = smul.addr %s527, 4
          %s529 = smul.addr %s528, 4
          %s530 = scalar_lea.vmem %s9, %s529
        $region56: #{tpu_custom_call.1} parent=15 // pred_fallthru
          _
        // Predicated region
        $region57: #{tpu_custom_call.1} parent=15 // pred_check
          %p531 = pneg %p322
        $region58: #{tpu_custom_call.1} parent=15 // pred_check_branch
          %533 = sbr.rel (%p531) target = $region60
        $region59: #{tpu_custom_call.1} parent=15 // pred_region
          %p534 = scmp.lt.s32.totalorder %s38, 1
          %s535 = scalar_select %p534, %s38, 1
          %s536 = scalar_lea.vmem %s10, %s535
        $region60: #{tpu_custom_call.1} parent=15 // pred_fallthru
          _
        // Predicated region
        $region61: #{tpu_custom_call.1} parent=15 // pred_check
          %p537 = pneg %p348
        $region62: #{tpu_custom_call.1} parent=15 // pred_check_branch
          %539 = sbr.rel (%p537) target = $region64
        $region63: #{tpu_custom_call.1} parent=15 // pred_region
          %p540 = scmp.lt.s32.totalorder %s38, 1
          %s541 = scalar_select %p540, %s38, 1
          %s542 = smul.addr %s541, 4
          %s543 = smul.addr %s542, 4
          %s544 = scalar_lea.vmem %s11, %s543
        $region64: #{tpu_custom_call.1} parent=15 // pred_fallthru
          _
      $region16: #{tpu_custom_call.1} parent=5 // pred_fallthru
        _
      %p545 = scmp.le.s32.totalorder 1, %s30
      %p546 = scmp.lt.s32.totalorder %s30, 5
      %p547 = pnand %p545, %p546
      %p548 = pneg %p547
      // Predicated region
      $region65: #{tpu_custom_call.1} parent=5 // pred_check
        _
      $region66: #{tpu_custom_call.1} parent=5 // pred_check_branch
        %550 = sbr.rel (%p547) target = $region68
      $region67: #{tpu_custom_call.1} parent=5 // pred_region
        %s551 = ssub.s32 %s30, 1
        %s552 = sand.u32 %s55, 1
        %s553 = scalar_lea.sflag [#allocation4], %s552
        %s554 = sand.u32 %s55, 1
        %s555 = smul.addr %s554, 8
        %s556 = scalar_lea.vmem [#allocation3], %s555
        // Predicated region
        $region69: #{tpu_custom_call.1} parent=67 // pred_check
          %p557 = pneg %p68
        $region70: #{tpu_custom_call.1} parent=67 // pred_check_branch
          %559 = sbr.rel (%p557) target = $region72
        $region71: #{tpu_custom_call.1} parent=67 // pred_region
          %560 = dma.done %s553, 128
        $region72: #{tpu_custom_call.1} parent=67 // pred_fallthru
          _
        %s561 = sand.u32 %s35, 1
        %s562 = scalar_lea.sflag [#allocation7], %s561
        %s563 = sand.u32 %s107, 1
        %s564 = scalar_lea.vmem [#allocation6], %s563
        // Predicated region
        $region73: #{tpu_custom_call.1} parent=67 // pred_check
          %p565 = pneg %p120
        $region74: #{tpu_custom_call.1} parent=67 // pred_check_branch
          %567 = sbr.rel (%p565) target = $region76
        $region75: #{tpu_custom_call.1} parent=67 // pred_region
          %568 = dma.done %s562, 16
        $region76: #{tpu_custom_call.1} parent=67 // pred_fallthru
          _
        %s569 = sand.u32 %s35, 1
        %s570 = scalar_lea.sflag [#allocation7], %s569
        %s571 = sand.u32 %s185, 1
        %s572 = smul.addr %s571, 16
        %s573 = scalar_lea.vmem [#allocation8], %s572
        // Predicated region
        $region77: #{tpu_custom_call.1} parent=67 // pred_check
          %p574 = pneg %p198
        $region78: #{tpu_custom_call.1} parent=67 // pred_check_branch
          %576 = sbr.rel (%p574) target = $region80
        $region79: #{tpu_custom_call.1} parent=67 // pred_region
          %577 = dma.done %s570, 256
        $region80: #{tpu_custom_call.1} parent=67 // pred_fallthru
          _
        %s578 = sand.u32 %s35, 1
        %s579 = scalar_lea.sflag [#allocation10], %s578
        %s580 = sand.u32 %s211, 1
        %s581 = smul.addr %s580, 16
        %s582 = scalar_lea.vmem [#allocation9], %s581
        // Predicated region
        $region81: #{tpu_custom_call.1} parent=67 // pred_check
          %p583 = pneg %p224
        $region82: #{tpu_custom_call.1} parent=67 // pred_check_branch
          %585 = sbr.rel (%p583) target = $region84
        $region83: #{tpu_custom_call.1} parent=67 // pred_region
          %586 = dma.done %s579, 256
        $region84: #{tpu_custom_call.1} parent=67 // pred_fallthru
          _
        %s587 = sand.u32 %s35, 1
        %s588 = scalar_lea.sflag [#allocation10], %s587
        %s589 = sand.u32 %s263, 1
        %s590 = scalar_lea.vmem [#allocation11], %s589
        // Predicated region
        $region85: #{tpu_custom_call.1} parent=67 // pred_check
          %p591 = pneg %p276
        $region86: #{tpu_custom_call.1} parent=67 // pred_check_branch
          %593 = sbr.rel (%p591) target = $region88
        $region87: #{tpu_custom_call.1} parent=67 // pred_region
          %594 = dma.done %s588, 16
        $region88: #{tpu_custom_call.1} parent=67 // pred_fallthru
          _
        %s595 = sand.u32 %s55, 1
        %s596 = scalar_lea.sflag [#allocation4], %s595
        %s597 = sand.u32 %s55, 1
        %s598 = smul.addr %s597, 8
        %s599 = scalar_lea.vmem [#allocation3], %s598
        %p600 = pneg %p68
        %p601 = pneg %p65
        %p602 = scmp.lt.s32.totalorder %s40, 1
        %s603 = scalar_select %p602, %s40, 1
        %s604 = scalar_lea.vmem %s1, %s603
        %p605 = pneg %p94
        %p606 = pneg %p91
        %s607 = sand.u32 %s35, 1
        %s608 = scalar_lea.sflag [#allocation7], %s607
        %s609 = sand.u32 %s107, 1
        %s610 = scalar_lea.vmem [#allocation6], %s609
        %p611 = pneg %p120
        %p612 = pneg %p117
        %p613 = scmp.lt.s32.totalorder %s40, 1
        %s614 = scalar_select %p613, %s40, 1
        %s615 = smul.addr %s614, 4
        %s616 = smul.addr %s615, 4
        %s617 = scalar_lea.vmem %s3, %s616
        %p618 = pneg %p146
        %p619 = pneg %p143
        %p620 = scmp.lt.s32.totalorder %s40, 1
        %s621 = scalar_select %p620, %s40, 1
        %s622 = smul.addr %s621, 4
        %s623 = smul.addr %s622, 4
        %s624 = scalar_lea.vmem %s4, %s623
        %p625 = pneg %p172
        %p626 = pneg %p169
        %s627 = sand.u32 %s35, 1
        %s628 = scalar_lea.sflag [#allocation7], %s627
        %s629 = sand.u32 %s185, 1
        %s630 = smul.addr %s629, 16
        %s631 = scalar_lea.vmem [#allocation8], %s630
        %p632 = pneg %p198
        %p633 = pneg %p195
        %s634 = sand.u32 %s35, 1
        %s635 = scalar_lea.sflag [#allocation10], %s634
        %s636 = sand.u32 %s211, 1
        %s637 = smul.addr %s636, 16
        %s638 = scalar_lea.vmem [#allocation9], %s637
        %p639 = pneg %p224
        %p640 = pneg %p221
        %p641 = scmp.lt.s32.totalorder %s40, 1
        %s642 = scalar_select %p641, %s40, 1
        %s643 = smul.addr %s642, 4
        %s644 = smul.addr %s643, 4
        %s645 = scalar_lea.vmem %s7, %s644
        %p646 = pneg %p250
        %p647 = pneg %p247
        %s648 = sand.u32 %s35, 1
        %s649 = scalar_lea.sflag [#allocation10], %s648
        %s650 = sand.u32 %s263, 1
        %s651 = scalar_lea.vmem [#allocation11], %s650
        %p652 = pneg %p276
        %p653 = pneg %p273
        %p654 = scmp.lt.s32.totalorder %s40, 1
        %s655 = scalar_select %p654, %s40, 1
        %s656 = smul.addr %s655, 4
        %s657 = smul.addr %s656, 4
        %s658 = scalar_lea.vmem %s9, %s657
        %p659 = pneg %p302
        %p660 = pneg %p299
        %p661 = scmp.lt.s32.totalorder %s40, 1
        %s662 = scalar_select %p661, %s40, 1
        %s663 = scalar_lea.vmem %s10, %s662
        %p664 = pneg %p328
        %p665 = pneg %p325
        %p666 = scmp.lt.s32.totalorder %s40, 1
        %s667 = scalar_select %p666, %s40, 1
        %s668 = smul.addr %s667, 4
        %s669 = smul.addr %s668, 4
        %s670 = scalar_lea.vmem %s11, %s669
        %p671 = pneg %p354
        %p672 = pneg %p351
        %p673 = pneg %p380
        %p674 = pneg %p377
        %s675 = sand.u32 %s367, 1
        %s676 = scalar_lea.sflag [#allocation5], %s675
        %s677 = sand.u32 %s367, 1
        %s678 = smul.addr %s677, 8
        %s679 = scalar_lea.vmem [#allocation12], %s678
        %p680 = scmp.lt.s32.totalorder %s40, 1
        %s681 = scalar_select %p680, %s40, 1
        %s682 = scalar_lea.vmem %s1, %s681
        %p683 = scmp.lt.s32.totalorder %s40, 1
        %s684 = scalar_select %p683, %s40, 1
        %s685 = smul.addr %s684, 4
        %s686 = smul.addr %s685, 4
        %s687 = scalar_lea.vmem %s3, %s686
        %p688 = scmp.lt.s32.totalorder %s40, 1
        %s689 = scalar_select %p688, %s40, 1
        %s690 = smul.addr %s689, 4
        %s691 = smul.addr %s690, 4
        %s692 = scalar_lea.vmem %s4, %s691
        %p693 = scmp.lt.s32.totalorder %s40, 1
        %s694 = scalar_select %p693, %s40, 1
        %s695 = smul.addr %s694, 4
        %s696 = smul.addr %s695, 4
        %s697 = scalar_lea.vmem %s7, %s696
        %p698 = scmp.lt.s32.totalorder %s40, 1
        %s699 = scalar_select %p698, %s40, 1
        %s700 = smul.addr %s699, 4
        %s701 = smul.addr %s700, 4
        %s702 = scalar_lea.vmem %s9, %s701
        %p703 = scmp.lt.s32.totalorder %s40, 1
        %s704 = scalar_select %p703, %s40, 1
        %s705 = scalar_lea.vmem %s10, %s704
        %p706 = scmp.lt.s32.totalorder %s40, 1
        %s707 = scalar_select %p706, %s40, 1
        %s708 = smul.addr %s707, 4
        %s709 = smul.addr %s708, 4
        %s710 = scalar_lea.vmem %s11, %s709
        %p712 = scmp.eq.s32.totalorder %s40, 0
        // Predicated region
        $region89: #{tpu_custom_call.1} parent=67 // pred_check
          %p713 = pneg %p712
        $region90: #{tpu_custom_call.1} parent=67 // pred_check_branch
          %715 = sbr.rel (%p713) target = $region92
        $region91: #{tpu_custom_call.1} parent=67 // pred_region
          %v716 = vld [vmem:[%s556] sm:$0xff]
          %vm717 = vcmask 261120
          %718 = vst.msk [vmem:[#allocation2] sm:$0xff] %vm717, %v716
        $region92: #{tpu_custom_call.1} parent=67 // pred_fallthru
          _
        %v719 = vld [vmem:[#allocation2] sm:$0xff]
        %vm720 = vcmask 261120
        %v721 = vsel %vm720, %v719, 0.0
        %722 = vadd.xlane.f32.xlu0 %v721
        %v723 = vpop.xlane.xlu0 %722
        %v724 = vrcp.pop 32.0
        %v725 = vmul.f32 %v723, %v724
        %v726 = vsub.f32 %v719, %v725
        %v727 = vmul.f32 %v726, %v726
        %v728 = vsel %vm720, %v727, 0.0
        %729 = vadd.xlane.f32.xlu0 %v728
        %v730 = vpop.xlane.xlu0 %729
        %v731 = vmul.f32 %v730, %v724
        %v732 = vadd.f32 %v731, 1e-05
        %v733 = vrsqrt.pop %v732
        %v734 = vmul.f32 %v726, %v733
        %v735 = vld [vmem:[%s682] sm:$0x1]
        %v737 = vlaneseq
        %v738 = vshrl.u32 %v737, 7
        %v739 = vsub.s32 0, %v738
        %v740 = vrot.slane %v735, %v739
        %v742 = vmul.f32 %v734, %v740
        %v743 = vld [vmem:[%s564] sm:$0x1]
        %v745 = vlaneseq
        %v746 = vshrl.u32 %v745, 7
        %v747 = vsub.s32 0, %v746
        %v748 = vrot.slane %v743, %v747
        %v750 = vadd.f32 %v742, %v748
        %v751 = vpack.c.bf16 %v750, %v750
        %v752 = vld [vmem:[%s687] sm:$0xf]
        %v753 = vld [vmem:[%s687 + $0x4] sm:$0xf]
        %v754 = vld [vmem:[%s687 + $0x8] sm:$0xf]
        %v755 = vld [vmem:[%s687 + $0xc] sm:$0xf]
        %v760 = vunpack.c.l.b16 %v752
        %v761 = vunpack.c.l.b16 %v753
        %v762 = vunpack.c.l.b16 %v754
        %v763 = vunpack.c.l.b16 %v755
        %v764 = vpack.c.b16 %v761, %v760
        %v765 = vpack.c.b16 %v763, %v762
        %v769 = vsel %vm720, %v751, 0
        %771 = vmatprep.subr.bf16.mxu0 0
        %772 = vmatpush1.bf16.msra.mxu0 %v764
        %773 = vmatprep.subr.bf16.mxu0 0
        %774 = vmatpush1.bf16.msra.mxu0 %v765
        %775 = vmatprep.subr.bf16.mxu0 0
        %776 = vmatpush1.bf16.msra.mxu0 0
        %777 = vmatprep.subr.bf16.mxu0 0
        %778 = vmatpush1.bf16.msra.mxu0 0
        %779 = vmatprep.subr.bf16.mxu0 0
        %780 = vmatpush1.bf16.msra.mxu0 0
        %781 = vmatprep.subr.bf16.mxu0 0
        %782 = vmatpush1.bf16.msra.mxu0 0
        %783 = vmatprep.subr.bf16.mxu0 0
        %784 = vmatpush1.bf16.msra.mxu0 0
        %785 = vmatprep.subr.bf16.mxu0 0
        %786 = vmatpush1.bf16.msra.mxu0 0
        %787 = vmatprep.subr.bf16.mxu0 0
        %788 = vmatpush1.bf16.msra.mxu0 0
        %789 = vmatprep.subr.bf16.mxu0 0
        %790 = vmatpush1.bf16.msra.mxu0 0
        %791 = vmatprep.subr.bf16.mxu0 0
        %792 = vmatpush1.bf16.msra.mxu0 0
        %793 = vmatprep.subr.bf16.mxu0 0
        %794 = vmatpush1.bf16.msra.mxu0 0
        %795 = vmatprep.subr.bf16.mxu0 0
        %796 = vmatpush1.bf16.msra.mxu0 0
        %797 = vmatprep.subr.bf16.mxu0 0
        %798 = vmatpush1.bf16.msra.mxu0 0
        %799 = vmatprep.subr.bf16.mxu0 0
        %800 = vmatpush1.bf16.msra.mxu0 0
        %801 = vmatprep.subr.bf16.mxu0 0
        %802 = vmatpush1.bf16.msra.mxu0 0
        %803 = vmatprep.mubr.bf16.mxu0 0
        %804 = vmatmul.mubr.bf16.gmra.mrb[0].mxu0 %v769
        %v805 = vpop.f32.mrb[0].mxu0
        %v806 = vadd.f32 0.0, %v805
        %v807 = vpop.f32.mrb[0].mxu0
        %v808 = vpop.f32.mrb[0].mxu0
        %v809 = vpop.f32.mrb[0].mxu0
        %810 = vdwg.mxu0
        %v811 = vld [vmem:[%s692] sm:$0xf]
        %v812 = vld [vmem:[%s692 + $0x4] sm:$0xf]
        %v813 = vld [vmem:[%s692 + $0x8] sm:$0xf]
        %v814 = vld [vmem:[%s692 + $0xc] sm:$0xf]
        %v819 = vunpack.c.l.b16 %v811
        %v820 = vunpack.c.l.b16 %v812
        %v821 = vunpack.c.l.b16 %v813
        %v822 = vunpack.c.l.b16 %v814
        %v823 = vpack.c.b16 %v820, %v819
        %v824 = vpack.c.b16 %v822, %v821
        %827 = vmatprep.subr.bf16.mxu0 0
        %828 = vmatpush1.bf16.msra.mxu0 %v823
        %829 = vmatprep.subr.bf16.mxu0 0
        %830 = vmatpush1.bf16.msra.mxu0 %v824
        %831 = vmatprep.subr.bf16.mxu0 0
        %832 = vmatpush1.bf16.msra.mxu0 0
        %833 = vmatprep.subr.bf16.mxu0 0
        %834 = vmatpush1.bf16.msra.mxu0 0
        %835 = vmatprep.subr.bf16.mxu0 0
        %836 = vmatpush1.bf16.msra.mxu0 0
        %837 = vmatprep.subr.bf16.mxu0 0
        %838 = vmatpush1.bf16.msra.mxu0 0
        %839 = vmatprep.subr.bf16.mxu0 0
        %840 = vmatpush1.bf16.msra.mxu0 0
        %841 = vmatprep.subr.bf16.mxu0 0
        %842 = vmatpush1.bf16.msra.mxu0 0
        %843 = vmatprep.subr.bf16.mxu0 0
        %844 = vmatpush1.bf16.msra.mxu0 0
        %845 = vmatprep.subr.bf16.mxu0 0
        %846 = vmatpush1.bf16.msra.mxu0 0
        %847 = vmatprep.subr.bf16.mxu0 0
        %848 = vmatpush1.bf16.msra.mxu0 0
        %849 = vmatprep.subr.bf16.mxu0 0
        %850 = vmatpush1.bf16.msra.mxu0 0
        %851 = vmatprep.subr.bf16.mxu0 0
        %852 = vmatpush1.bf16.msra.mxu0 0
        %853 = vmatprep.subr.bf16.mxu0 0
        %854 = vmatpush1.bf16.msra.mxu0 0
        %855 = vmatprep.subr.bf16.mxu0 0
        %856 = vmatpush1.bf16.msra.mxu0 0
        %857 = vmatprep.subr.bf16.mxu0 0
        %858 = vmatpush1.bf16.msra.mxu0 0
        %859 = vmatprep.mubr.bf16.mxu0 0
        %860 = vmatmul.mubr.bf16.gmra.mrb[0].mxu0 %v769
        %v861 = vpop.f32.mrb[0].mxu0
        %v862 = vadd.f32 0.0, %v861
        %v863 = vpop.f32.mrb[0].mxu0
        %v864 = vpop.f32.mrb[0].mxu0
        %v865 = vpop.f32.mrb[0].mxu0
        %866 = vdwg.mxu0
        %v867 = vmul.f32 %v862, 0.35355338
        %v868 = vld [vmem:[%s573] sm:$0xf]
        %v869 = vld [vmem:[%s573 + $0x4] sm:$0xf]
        %v870 = vld [vmem:[%s573 + $0x8] sm:$0xf]
        %v871 = vld [vmem:[%s573 + $0xc] sm:$0xf]
        %v876 = vunpack.c.l.b16 %v868
        %v877 = vunpack.c.l.b16 %v869
        %v878 = vunpack.c.l.b16 %v870
        %v879 = vunpack.c.l.b16 %v871
        %v880 = vpack.c.b16 %v877, %v876
        %v881 = vpack.c.b16 %v879, %v878
        %884 = vmatprep.subr.bf16.mxu0 0
        %885 = vmatpush1.bf16.msra.mxu0 %v880
        %886 = vmatprep.subr.bf16.mxu0 0
        %887 = vmatpush1.bf16.msra.mxu0 %v881
        %888 = vmatprep.subr.bf16.mxu0 0
        %889 = vmatpush1.bf16.msra.mxu0 0
        %890 = vmatprep.subr.bf16.mxu0 0
        %891 = vmatpush1.bf16.msra.mxu0 0
        %892 = vmatprep.subr.bf16.mxu0 0
        %893 = vmatpush1.bf16.msra.mxu0 0
        %894 = vmatprep.subr.bf16.mxu0 0
        %895 = vmatpush1.bf16.msra.mxu0 0
        %896 = vmatprep.subr.bf16.mxu0 0
        %897 = vmatpush1.bf16.msra.mxu0 0
        %898 = vmatprep.subr.bf16.mxu0 0
        %899 = vmatpush1.bf16.msra.mxu0 0
        %900 = vmatprep.subr.bf16.mxu0 0
        %901 = vmatpush1.bf16.msra.mxu0 0
        %902 = vmatprep.subr.bf16.mxu0 0
        %903 = vmatpush1.bf16.msra.mxu0 0
        %904 = vmatprep.subr.bf16.mxu0 0
        %905 = vmatpush1.bf16.msra.mxu0 0
        %906 = vmatprep.subr.bf16.mxu0 0
        %907 = vmatpush1.bf16.msra.mxu0 0
        %908 = vmatprep.subr.bf16.mxu0 0
        %909 = vmatpush1.bf16.msra.mxu0 0
        %910 = vmatprep.subr.bf16.mxu0 0
        %911 = vmatpush1.bf16.msra.mxu0 0
        %912 = vmatprep.subr.bf16.mxu0 0
        %913 = vmatpush1.bf16.msra.mxu0 0
        %914 = vmatprep.subr.bf16.mxu0 0
        %915 = vmatpush1.bf16.msra.mxu0 0
        %916 = vmatprep.mubr.bf16.mxu0 0
        %917 = vmatmul.mubr.bf16.gmra.mrb[0].mxu0 %v769
        %v918 = vpop.f32.mrb[0].mxu0
        %v919 = vadd.f32 0.0, %v918
        %v920 = vpop.f32.mrb[0].mxu0
        %v921 = vpop.f32.mrb[0].mxu0
        %v922 = vpop.f32.mrb[0].mxu0
        %923 = vdwg.mxu0
        %v924 = vld [vmem:[%s582] sm:$0xf]
        %v925 = vld [vmem:[%s582 + $0x4] sm:$0xf]
        %v926 = vld [vmem:[%s582 + $0x8] sm:$0xf]
        %v927 = vld [vmem:[%s582 + $0xc] sm:$0xf]
        %v932 = vunpack.c.l.b16 %v924
        %v933 = vunpack.c.l.b16 %v925
        %v934 = vunpack.c.l.b16 %v926
        %v935 = vunpack.c.l.b16 %v927
        %v936 = vpack.c.b16 %v933, %v932
        %v937 = vpack.c.b16 %v935, %v934
        %940 = vmatprep.subr.bf16.mxu0 0
        %941 = vmatpush1.bf16.msra.mxu0 %v936
        %942 = vmatprep.subr.bf16.mxu0 0
        %943 = vmatpush1.bf16.msra.mxu0 %v937
        %944 = vmatprep.subr.bf16.mxu0 0
        %945 = vmatpush1.bf16.msra.mxu0 0
        %946 = vmatprep.subr.bf16.mxu0 0
        %947 = vmatpush1.bf16.msra.mxu0 0
        %948 = vmatprep.subr.bf16.mxu0 0
        %949 = vmatpush1.bf16.msra.mxu0 0
        %950 = vmatprep.subr.bf16.mxu0 0
        %951 = vmatpush1.bf16.msra.mxu0 0
        %952 = vmatprep.subr.bf16.mxu0 0
        %953 = vmatpush1.bf16.msra.mxu0 0
        %954 = vmatprep.subr.bf16.mxu0 0
        %955 = vmatpush1.bf16.msra.mxu0 0
        %956 = vmatprep.subr.bf16.mxu0 0
        %957 = vmatpush1.bf16.msra.mxu0 0
        %958 = vmatprep.subr.bf16.mxu0 0
        %959 = vmatpush1.bf16.msra.mxu0 0
        %960 = vmatprep.subr.bf16.mxu0 0
        %961 = vmatpush1.bf16.msra.mxu0 0
        %962 = vmatprep.subr.bf16.mxu0 0
        %963 = vmatpush1.bf16.msra.mxu0 0
        %964 = vmatprep.subr.bf16.mxu0 0
        %965 = vmatpush1.bf16.msra.mxu0 0
        %966 = vmatprep.subr.bf16.mxu0 0
        %967 = vmatpush1.bf16.msra.mxu0 0
        %968 = vmatprep.subr.bf16.mxu0 0
        %969 = vmatpush1.bf16.msra.mxu0 0
        %970 = vmatprep.subr.bf16.mxu0 0
        %971 = vmatpush1.bf16.msra.mxu0 0
        %972 = vmatprep.mubr.bf16.mxu0 0
        %973 = vmatmul.mubr.bf16.gmra.mrb[0].mxu0 %v769
        %v974 = vpop.f32.mrb[0].mxu0
        %v975 = vadd.f32 0.0, %v974
        %v976 = vpop.f32.mrb[0].mxu0
        %v977 = vpop.f32.mrb[0].mxu0
        %v978 = vpop.f32.mrb[0].mxu0
        %979 = vdwg.mxu0
        %v980 = vxor.u32 %v975, 2147483648
        %v981 = vmul.f32 %v980, 1.442695
        %v982 = vpow.pop %v981
        %v983 = vadd.f32 %v982, 1.0
        %v984 = vrcp.pop %v983
        %v985 = vmul.f32 1.0, %v984
        %v986 = vld [vmem:[%s697] sm:$0xf]
        %v987 = vld [vmem:[%s697 + $0x4] sm:$0xf]
        %v988 = vld [vmem:[%s697 + $0x8] sm:$0xf]
        %v989 = vld [vmem:[%s697 + $0xc] sm:$0xf]
        %v990 = vld [vmem:[%s590] sm:$0x1]
        %v992 = vlaneseq
        %v993 = vshrl.u32 %v992, 7
        %v994 = vsub.s32 0, %v993
        %v995 = vrot.slane %v990, %v994
        %v1001 = vunpack.c.l.b16 %v986
        %v1002 = vunpack.c.l.b16 %v987
        %v1003 = vunpack.c.l.b16 %v988
        %v1004 = vunpack.c.l.b16 %v989
        %v1005 = vpack.c.b16 %v1002, %v1001
        %v1006 = vpack.c.b16 %v1004, %v1003
        %1009 = vmatprep.subr.bf16.mxu0 0
        %1010 = vmatpush1.bf16.msra.mxu0 %v1005
        %1011 = vmatprep.subr.bf16.mxu0 0
        %1012 = vmatpush1.bf16.msra.mxu0 %v1006
        %1013 = vmatprep.subr.bf16.mxu0 0
        %1014 = vmatpush1.bf16.msra.mxu0 0
        %1015 = vmatprep.subr.bf16.mxu0 0
        %1016 = vmatpush1.bf16.msra.mxu0 0
        %1017 = vmatprep.subr.bf16.mxu0 0
        %1018 = vmatpush1.bf16.msra.mxu0 0
        %1019 = vmatprep.subr.bf16.mxu0 0
        %1020 = vmatpush1.bf16.msra.mxu0 0
        %1021 = vmatprep.subr.bf16.mxu0 0
        %1022 = vmatpush1.bf16.msra.mxu0 0
        %1023 = vmatprep.subr.bf16.mxu0 0
        %1024 = vmatpush1.bf16.msra.mxu0 0
        %1025 = vmatprep.subr.bf16.mxu0 0
        %1026 = vmatpush1.bf16.msra.mxu0 0
        %1027 = vmatprep.subr.bf16.mxu0 0
        %1028 = vmatpush1.bf16.msra.mxu0 0
        %1029 = vmatprep.subr.bf16.mxu0 0
        %1030 = vmatpush1.bf16.msra.mxu0 0
        %1031 = vmatprep.subr.bf16.mxu0 0
        %1032 = vmatpush1.bf16.msra.mxu0 0
        %1033 = vmatprep.subr.bf16.mxu0 0
        %1034 = vmatpush1.bf16.msra.mxu0 0
        %1035 = vmatprep.subr.bf16.mxu0 0
        %1036 = vmatpush1.bf16.msra.mxu0 0
        %1037 = vmatprep.subr.bf16.mxu0 0
        %1038 = vmatpush1.bf16.msra.mxu0 0
        %1039 = vmatprep.subr.bf16.mxu0 0
        %1040 = vmatpush1.bf16.msra.mxu0 0
        %1041 = vmatprep.mubr.bf16.mxu0 0
        %1042 = vmatmul.mubr.bf16.gmra.mrb[0].mxu0 %v769
        %v1043 = vpop.f32.mrb[0].mxu0
        %v1044 = vadd.f32 %v995, %v1043
        %v1045 = vpop.f32.mrb[0].mxu0
        %v1046 = vpop.f32.mrb[0].mxu0
        %v1047 = vpop.f32.mrb[0].mxu0
        %1048 = vdwg.mxu0
        %v1049 = vld [vmem:[%s702] sm:$0xf]
        %v1050 = vld [vmem:[%s702 + $0x4] sm:$0xf]
        %v1051 = vld [vmem:[%s702 + $0x8] sm:$0xf]
        %v1052 = vld [vmem:[%s702 + $0xc] sm:$0xf]
        %v1053 = vld [vmem:[%s705] sm:$0x1]
        %v1055 = vlaneseq
        %v1056 = vshrl.u32 %v1055, 7
        %v1057 = vsub.s32 0, %v1056
        %v1058 = vrot.slane %v1053, %v1057
        %v1064 = vunpack.c.l.b16 %v1049
        %v1065 = vunpack.c.l.b16 %v1050
        %v1066 = vunpack.c.l.b16 %v1051
        %v1067 = vunpack.c.l.b16 %v1052
        %v1068 = vpack.c.b16 %v1065, %v1064
        %v1069 = vpack.c.b16 %v1067, %v1066
        %1072 = vmatprep.subr.bf16.mxu0 0
        %1073 = vmatpush1.bf16.msra.mxu0 %v1068
        %1074 = vmatprep.subr.bf16.mxu0 0
        %1075 = vmatpush1.bf16.msra.mxu0 %v1069
        %1076 = vmatprep.subr.bf16.mxu0 0
        %1077 = vmatpush1.bf16.msra.mxu0 0
        %1078 = vmatprep.subr.bf16.mxu0 0
        %1079 = vmatpush1.bf16.msra.mxu0 0
        %1080 = vmatprep.subr.bf16.mxu0 0
        %1081 = vmatpush1.bf16.msra.mxu0 0
        %1082 = vmatprep.subr.bf16.mxu0 0
        %1083 = vmatpush1.bf16.msra.mxu0 0
        %1084 = vmatprep.subr.bf16.mxu0 0
        %1085 = vmatpush1.bf16.msra.mxu0 0
        %1086 = vmatprep.subr.bf16.mxu0 0
        %1087 = vmatpush1.bf16.msra.mxu0 0
        %1088 = vmatprep.subr.bf16.mxu0 0
        %1089 = vmatpush1.bf16.msra.mxu0 0
        %1090 = vmatprep.subr.bf16.mxu0 0
        %1091 = vmatpush1.bf16.msra.mxu0 0
        %1092 = vmatprep.subr.bf16.mxu0 0
        %1093 = vmatpush1.bf16.msra.mxu0 0
        %1094 = vmatprep.subr.bf16.mxu0 0
        %1095 = vmatpush1.bf16.msra.mxu0 0
        %1096 = vmatprep.subr.bf16.mxu0 0
        %1097 = vmatpush1.bf16.msra.mxu0 0
        %1098 = vmatprep.subr.bf16.mxu0 0
        %1099 = vmatpush1.bf16.msra.mxu0 0
        %1100 = vmatprep.subr.bf16.mxu0 0
        %1101 = vmatpush1.bf16.msra.mxu0 0
        %1102 = vmatprep.subr.bf16.mxu0 0
        %1103 = vmatpush1.bf16.msra.mxu0 0
        %1104 = vmatprep.mubr.bf16.mxu0 0
        %1105 = vmatmul.mubr.bf16.gmra.mrb[0].mxu0 %v769
        %v1106 = vpop.f32.mrb[0].mxu0
        %v1107 = vadd.f32 %v1058, %v1106
        %v1108 = vpop.f32.mrb[0].mxu0
        %v1109 = vpop.f32.mrb[0].mxu0
        %v1110 = vpop.f32.mrb[0].mxu0
        %1111 = vdwg.mxu0
        %v1112 = vsub.f32 0.0, %v1107
        %v1113 = vmax.f32 %v1112, 0.0
        %vm1114 = vcmp.ne.f32.partialorder %v1112, %v1112
        %v1115 = vadd.f32 %v1112, 0.0
        %v1116 = vand.u32 2147483647, %v1112
        %v1117 = vsub.f32 0.0, %v1116
        %v1118 = vmul.f32 %v1117, 1.442695
        %v1119 = vpow.pop %v1118
        %v1120 = vadd.f32 %v1119, 1.0
        %v1121 = vlog2.pop %v1120
        %v1122 = vmul.f32 %v1121, 0.6931472
        %v1123 = vmul.f32 -0.5, %v1119
        %v1124 = vadd.f32 %v1123, 1.0
        %v1125 = vmul.f32 %v1124, %v1119
        %v1126 = vand.u32 2147483647, %v1119
        %vm1127 = vcmp.lt.f32.partialorder %v1126, 0.0004427343
        %v1128 = vsel %vm1127, %v1125, %v1122
        %v1129 = vadd.f32 %v1113, %v1128
        %v1130 = vsel %vm1114, %v1115, %v1129
        %v1131 = vsub.f32 0.0, %v1130
        %v1132 = vpack.c.bf16 %v806, %v806
        %1134 = vrot.lane.b32.xlu0 %v1132, 120
        %v1135 = vpop.permute.xlu0 %1134
        %1136 = vrot.lane.b32.xlu0 %v1132, 112
        %v1137 = vpop.permute.xlu0 %1136
        %1138 = vrot.lane.b32.xlu0 %v1132, 104
        %v1139 = vpop.permute.xlu0 %1138
        %v1140 = vpack.c.bf16 %v867, %v867
        %1142 = vrot.lane.b32.xlu0 %v1140, 120
        %v1143 = vpop.permute.xlu0 %1142
        %1144 = vrot.lane.b32.xlu0 %v1140, 112
        %v1145 = vpop.permute.xlu0 %1144
        %1146 = vrot.lane.b32.xlu0 %v1140, 104
        %v1147 = vpop.permute.xlu0 %1146
        %v1148 = vpack.c.bf16 %v919, %v919
        %1150 = vrot.lane.b32.xlu0 %v1148, 120
        %v1151 = vpop.permute.xlu0 %1150
        %1152 = vrot.lane.b32.xlu0 %v1148, 112
        %v1153 = vpop.permute.xlu0 %1152
        %1154 = vrot.lane.b32.xlu0 %v1148, 104
        %v1155 = vpop.permute.xlu0 %1154
        %v1156 = vlaneseq
        %v1157 = vshrl.u32 %v1156, 7
        %v1158 = vlaneseq
        %v1159 = vand.u32 %v1158, 127
        %vm1160 = vcmp.ge.s32.totalorder %v1157, %v1159
        %v1161 = vsel %vm1160, 1, 0
        %v1162 = vcvt.s32.f32 %v1161
        %vm1163 = vcmask 64512
        %v1165 = vsel %vm1163, %v1162, 0
        %1167 = vmatprep.subr.mxu0 0.0
        %1168 = vmatpush1.msra.mxu0 %v1131
        %1169 = vmatprep.subr.mxu0 0.0
        %1170 = vmatpush1.msra.mxu0 0.0
        %1171 = vmatprep.subr.mxu0 0.0
        %1172 = vmatpush1.msra.mxu0 0.0
        %1173 = vmatprep.subr.mxu0 0.0
        %1174 = vmatpush1.msra.mxu0 0.0
        %1175 = vmatprep.subr.mxu0 0.0
        %1176 = vmatpush1.msra.mxu0 0.0
        %1177 = vmatprep.subr.mxu0 0.0
        %1178 = vmatpush1.msra.mxu0 0.0
        %1179 = vmatprep.subr.mxu0 0.0
        %1180 = vmatpush1.msra.mxu0 0.0
        %1181 = vmatprep.subr.mxu0 0.0
        %1182 = vmatpush1.msra.mxu0 0.0
        %1183 = vmatprep.subr.mxu0 0.0
        %1184 = vmatpush1.msra.mxu0 0.0
        %1185 = vmatprep.subr.mxu0 0.0
        %1186 = vmatpush1.msra.mxu0 0.0
        %1187 = vmatprep.subr.mxu0 0.0
        %1188 = vmatpush1.msra.mxu0 0.0
        %1189 = vmatprep.subr.mxu0 0.0
        %1190 = vmatpush1.msra.mxu0 0.0
        %1191 = vmatprep.subr.mxu0 0.0
        %1192 = vmatpush1.msra.mxu0 0.0
        %1193 = vmatprep.subr.mxu0 0.0
        %1194 = vmatpush1.msra.mxu0 0.0
        %1195 = vmatprep.subr.mxu0 0.0
        %1196 = vmatpush1.msra.mxu0 0.0
        %1197 = vmatprep.subr.mxu0 0.0
        %1198 = vmatpush1.msra.mxu0 0.0
        %1199 = vmatprep.subr.mxu0 0.0
        %1200 = vmatpush1.msra.mxu0 0.0
        %1201 = vmatprep.subr.mxu0 0.0
        %1202 = vmatpush1.msra.mxu0 0.0
        %1203 = vmatprep.subr.mxu0 0.0
        %1204 = vmatpush1.msra.mxu0 0.0
        %1205 = vmatprep.subr.mxu0 0.0
        %1206 = vmatpush1.msra.mxu0 0.0
        %1207 = vmatprep.subr.mxu0 0.0
        %1208 = vmatpush1.msra.mxu0 0.0
        %1209 = vmatprep.subr.mxu0 0.0
        %1210 = vmatpush1.msra.mxu0 0.0
        %1211 = vmatprep.subr.mxu0 0.0
        %1212 = vmatpush1.msra.mxu0 0.0
        %1213 = vmatprep.subr.mxu0 0.0
        %1214 = vmatpush1.msra.mxu0 0.0
        %1215 = vmatprep.subr.mxu0 0.0
        %1216 = vmatpush1.msra.mxu0 0.0
        %1217 = vmatprep.subr.mxu0 0.0
        %1218 = vmatpush1.msra.mxu0 0.0
        %1219 = vmatprep.subr.mxu0 0.0
        %1220 = vmatpush1.msra.mxu0 0.0
        %1221 = vmatprep.subr.mxu0 0.0
        %1222 = vmatpush1.msra.mxu0 0.0
        %1223 = vmatprep.subr.mxu0 0.0
        %1224 = vmatpush1.msra.mxu0 0.0
        %1225 = vmatprep.subr.mxu0 0.0
        %1226 = vmatpush1.msra.mxu0 0.0
        %1227 = vmatprep.subr.mxu0 0.0
        %1228 = vmatpush1.msra.mxu0 0.0
        %1229 = vmatprep.subr.mxu0 0.0
        %1230 = vmatpush1.msra.mxu0 0.0
        %1231 = vmatprep.mubr.f32.mxu0 0.0
        %1232 = vmatmul.mubr.f32.gmra.mrb[0].mxu0 %v1165
        %v1233 = vpop.f32.mrb[0].mxu0
        %v1234 = vadd.f32 0.0, %v1233
        %v1235 = vpop.f32.mrb[0].mxu0
        %1236 = vdwg.mxu0
        %1238 = vrot.lane.b32.xlu0 %v1234, 127
        %v1239 = vpop.permute.xlu0 %1238
        %1240 = vrot.lane.b32.xlu0 %v1234, 126
        %v1241 = vpop.permute.xlu0 %1240
        %1242 = vrot.lane.b32.xlu0 %v1234, 125
        %v1243 = vpop.permute.xlu0 %1242
        %v1244 = vsub.f32 %v1044, %v1234
        %1245 = vxpose.xlu0.b32.start [1/16] %v1244, 128
        %1246 = vxpose.xlu0.b32.cont [2/16] 0.0, 128
        %1247 = vxpose.xlu0.b32.cont [3/16] 0.0, 128
        %1248 = vxpose.xlu0.b32.cont [4/16] 0.0, 128
        %1249 = vxpose.xlu0.b32.cont [5/16] 0.0, 128
        %1250 = vxpose.xlu0.b32.cont [6/16] 0.0, 128
        %1251 = vxpose.xlu0.b32.cont [7/16] 0.0, 128
        %1252 = vxpose.xlu0.b32.cont [8/16] 0.0, 128
        %1253 = vxpose.xlu0.b32.cont [9/16] 0.0, 128
        %1254 = vxpose.xlu0.b32.cont [10/16] 0.0, 128
        %1255 = vxpose.xlu0.b32.cont [11/16] 0.0, 128
        %1256 = vxpose.xlu0.b32.cont [12/16] 0.0, 128
        %1257 = vxpose.xlu0.b32.cont [13/16] 0.0, 128
        %1258 = vxpose.xlu0.b32.cont [14/16] 0.0, 128
        %1259 = vxpose.xlu0.b32.cont [15/16] 0.0, 128
        %1260 = vxpose.xlu0.b32.end [16/16] 0.0, 128
        %v1261 = vpop.trf.xlu0
        %v1262 = vpop.trf.xlu0
        %v1263 = vpop.trf.xlu0
        %v1264 = vpop.trf.xlu0
        %v1265 = vpop.trf.xlu0
        %v1266 = vpop.trf.xlu0
        %v1267 = vpop.trf.xlu0
        %v1268 = vpop.trf.xlu0
        %v1269 = vpop.trf.xlu0
        %v1270 = vpop.trf.xlu0
        %v1271 = vpop.trf.xlu0
        %v1272 = vpop.trf.xlu0
        %v1273 = vpop.trf.xlu0
        %v1274 = vpop.trf.xlu0
        %v1275 = vpop.trf.xlu0
        %v1276 = vpop.trf.xlu0
        %v1278 = vrot.slane %v1261, 1
        %v1280 = vrot.slane %v1261, 2
        %v1282 = vrot.slane %v1261, 3
        %v1285 = vsel %vm1163, %v1132, 0
        %v1288 = vsel %vm1163, %v1140, 0
        %1290 = vmatprep.subr.bf16.mxu0 0
        %1291 = vmatpush1.bf16.xpose.msra.mxu0 %v1288
        %1292 = vmatprep.subr.bf16.mxu0 0
        %1293 = vmatpush1.bf16.xpose.msra.mxu0 0
        %1294 = vmatprep.subr.bf16.mxu0 0
        %1295 = vmatpush1.bf16.xpose.msra.mxu0 0
        %1296 = vmatprep.subr.bf16.mxu0 0
        %1297 = vmatpush1.bf16.xpose.msra.mxu0 0
        %1298 = vmatprep.subr.bf16.mxu0 0
        %1299 = vmatpush1.bf16.xpose.msra.mxu0 0
        %1300 = vmatprep.subr.bf16.mxu0 0
        %1301 = vmatpush1.bf16.xpose.msra.mxu0 0
        %1302 = vmatprep.subr.bf16.mxu0 0
        %1303 = vmatpush1.bf16.xpose.msra.mxu0 0
        %1304 = vmatprep.subr.bf16.mxu0 0
        %1305 = vmatpush1.bf16.xpose.msra.mxu0 0
        %1306 = vmatprep.subr.bf16.mxu0 0
        %1307 = vmatpush1.bf16.xpose.msra.mxu0 0
        %1308 = vmatprep.subr.bf16.mxu0 0
        %1309 = vmatpush1.bf16.xpose.msra.mxu0 0
        %1310 = vmatprep.subr.bf16.mxu0 0
        %1311 = vmatpush1.bf16.xpose.msra.mxu0 0
        %1312 = vmatprep.subr.bf16.mxu0 0
        %1313 = vmatpush1.bf16.xpose.msra.mxu0 0
        %1314 = vmatprep.subr.bf16.mxu0 0
        %1315 = vmatpush1.bf16.xpose.msra.mxu0 0
        %1316 = vmatprep.subr.bf16.mxu0 0
        %1317 = vmatpush1.bf16.xpose.msra.mxu0 0
        %1318 = vmatprep.subr.bf16.mxu0 0
        %1319 = vmatpush1.bf16.xpose.msra.mxu0 0
        %1320 = vmatprep.subr.bf16.mxu0 0
        %1321 = vmatpush1.bf16.xpose.msra.mxu0 0
        %1322 = vmatprep.mubr.bf16.mxu0 0
        %1323 = vmatmul.mubr.bf16.gmra.mrb[0].mxu0 %v1285
        %v1324 = vpop.f32.mrb[0].mxu0
        %v1325 = vadd.f32 0.0, %v1324
        %v1326 = vpop.f32.mrb[0].mxu0
        %v1327 = vpop.f32.mrb[0].mxu0
        %v1328 = vpop.f32.mrb[0].mxu0
        %1329 = vdwg.mxu0
        %v1331 = vsel %vm1163, %v1135, 0
        %v1334 = vsel %vm1163, %v1143, 0
        %1336 = vmatprep.subr.bf16.mxu0 0
        %1337 = vmatpush1.bf16.xpose.msra.mxu0 %v1334
        %1338 = vmatprep.subr.bf16.mxu0 0
        %1339 = vmatpush1.bf16.xpose.msra.mxu0 0
        %1340 = vmatprep.subr.bf16.mxu0 0
        %1341 = vmatpush1.bf16.xpose.msra.mxu0 0
        %1342 = vmatprep.subr.bf16.mxu0 0
        %1343 = vmatpush1.bf16.xpose.msra.mxu0 0
        %1344 = vmatprep.subr.bf16.mxu0 0
        %1345 = vmatpush1.bf16.xpose.msra.mxu0 0
        %1346 = vmatprep.subr.bf16.mxu0 0
        %1347 = vmatpush1.bf16.xpose.msra.mxu0 0
        %1348 = vmatprep.subr.bf16.mxu0 0
        %1349 = vmatpush1.bf16.xpose.msra.mxu0 0
        %1350 = vmatprep.subr.bf16.mxu0 0
        %1351 = vmatpush1.bf16.xpose.msra.mxu0 0
        %1352 = vmatprep.subr.bf16.mxu0 0
        %1353 = vmatpush1.bf16.xpose.msra.mxu0 0
        %1354 = vmatprep.subr.bf16.mxu0 0
        %1355 = vmatpush1.bf16.xpose.msra.mxu0 0
        %1356 = vmatprep.subr.bf16.mxu0 0
        %1357 = vmatpush1.bf16.xpose.msra.mxu0 0
        %1358 = vmatprep.subr.bf16.mxu0 0
        %1359 = vmatpush1.bf16.xpose.msra.mxu0 0
        %1360 = vmatprep.subr.bf16.mxu0 0
        %1361 = vmatpush1.bf16.xpose.msra.mxu0 0
        %1362 = vmatprep.subr.bf16.mxu0 0
        %1363 = vmatpush1.bf16.xpose.msra.mxu0 0
        %1364 = vmatprep.subr.bf16.mxu0 0
        %1365 = vmatpush1.bf16.xpose.msra.mxu0 0
        %1366 = vmatprep.subr.bf16.mxu0 0
        %1367 = vmatpush1.bf16.xpose.msra.mxu0 0
        %1368 = vmatprep.mubr.bf16.mxu0 0
        %1369 = vmatmul.mubr.bf16.gmra.mrb[0].mxu0 %v1331
        %v1370 = vpop.f32.mrb[0].mxu0
        %v1371 = vadd.f32 0.0, %v1370
        %v1372 = vpop.f32.mrb[0].mxu0
        %v1373 = vpop.f32.mrb[0].mxu0
        %v1374 = vpop.f32.mrb[0].mxu0
        %1375 = vdwg.mxu0
        %v1377 = vsel %vm1163, %v1137, 0
        %v1380 = vsel %vm1163, %v1145, 0
        %1382 = vmatprep.subr.bf16.mxu0 0
        %1383 = vmatpush1.bf16.xpose.msra.mxu0 %v1380
        %1384 = vmatprep.subr.bf16.mxu0 0
        %1385 = vmatpush1.bf16.xpose.msra.mxu0 0
        %1386 = vmatprep.subr.bf16.mxu0 0
        %1387 = vmatpush1.bf16.xpose.msra.mxu0 0
        %1388 = vmatprep.subr.bf16.mxu0 0
        %1389 = vmatpush1.bf16.xpose.msra.mxu0 0
        %1390 = vmatprep.subr.bf16.mxu0 0
        %1391 = vmatpush1.bf16.xpose.msra.mxu0 0
        %1392 = vmatprep.subr.bf16.mxu0 0
        %1393 = vmatpush1.bf16.xpose.msra.mxu0 0
        %1394 = vmatprep.subr.bf16.mxu0 0
        %1395 = vmatpush1.bf16.xpose.msra.mxu0 0
        %1396 = vmatprep.subr.bf16.mxu0 0
        %1397 = vmatpush1.bf16.xpose.msra.mxu0 0
        %1398 = vmatprep.subr.bf16.mxu0 0
        %1399 = vmatpush1.bf16.xpose.msra.mxu0 0
        %1400 = vmatprep.subr.bf16.mxu0 0
        %1401 = vmatpush1.bf16.xpose.msra.mxu0 0
        %1402 = vmatprep.subr.bf16.mxu0 0
        %1403 = vmatpush1.bf16.xpose.msra.mxu0 0
        %1404 = vmatprep.subr.bf16.mxu0 0
        %1405 = vmatpush1.bf16.xpose.msra.mxu0 0
        %1406 = vmatprep.subr.bf16.mxu0 0
        %1407 = vmatpush1.bf16.xpose.msra.mxu0 0
        %1408 = vmatprep.subr.bf16.mxu0 0
        %1409 = vmatpush1.bf16.xpose.msra.mxu0 0
        %1410 = vmatprep.subr.bf16.mxu0 0
        %1411 = vmatpush1.bf16.xpose.msra.mxu0 0
        %1412 = vmatprep.subr.bf16.mxu0 0
        %1413 = vmatpush1.bf16.xpose.msra.mxu0 0
        %1414 = vmatprep.mubr.bf16.mxu0 0
        %1415 = vmatmul.mubr.bf16.gmra.mrb[0].mxu0 %v1377
        %v1416 = vpop.f32.mrb[0].mxu0
        %v1417 = vadd.f32 0.0, %v1416
        %v1418 = vpop.f32.mrb[0].mxu0
        %v1419 = vpop.f32.mrb[0].mxu0
        %v1420 = vpop.f32.mrb[0].mxu0
        %1421 = vdwg.mxu0
        %v1423 = vsel %vm1163, %v1139, 0
        %v1426 = vsel %vm1163, %v1147, 0
        %1428 = vmatprep.subr.bf16.mxu0 0
        %1429 = vmatpush1.bf16.xpose.msra.mxu0 %v1426
        %1430 = vmatprep.subr.bf16.mxu0 0
        %1431 = vmatpush1.bf16.xpose.msra.mxu0 0
        %1432 = vmatprep.subr.bf16.mxu0 0
        %1433 = vmatpush1.bf16.xpose.msra.mxu0 0
        %1434 = vmatprep.subr.bf16.mxu0 0
        %1435 = vmatpush1.bf16.xpose.msra.mxu0 0
        %1436 = vmatprep.subr.bf16.mxu0 0
        %1437 = vmatpush1.bf16.xpose.msra.mxu0 0
        %1438 = vmatprep.subr.bf16.mxu0 0
        %1439 = vmatpush1.bf16.xpose.msra.mxu0 0
        %1440 = vmatprep.subr.bf16.mxu0 0
        %1441 = vmatpush1.bf16.xpose.msra.mxu0 0
        %1442 = vmatprep.subr.bf16.mxu0 0
        %1443 = vmatpush1.bf16.xpose.msra.mxu0 0
        %1444 = vmatprep.subr.bf16.mxu0 0
        %1445 = vmatpush1.bf16.xpose.msra.mxu0 0
        %1446 = vmatprep.subr.bf16.mxu0 0
        %1447 = vmatpush1.bf16.xpose.msra.mxu0 0
        %1448 = vmatprep.subr.bf16.mxu0 0
        %1449 = vmatpush1.bf16.xpose.msra.mxu0 0
        %1450 = vmatprep.subr.bf16.mxu0 0
        %1451 = vmatpush1.bf16.xpose.msra.mxu0 0
        %1452 = vmatprep.subr.bf16.mxu0 0
        %1453 = vmatpush1.bf16.xpose.msra.mxu0 0
        %1454 = vmatprep.subr.bf16.mxu0 0
        %1455 = vmatpush1.bf16.xpose.msra.mxu0 0
        %1456 = vmatprep.subr.bf16.mxu0 0
        %1457 = vmatpush1.bf16.xpose.msra.mxu0 0
        %1458 = vmatprep.subr.bf16.mxu0 0
        %1459 = vmatpush1.bf16.xpose.msra.mxu0 0
        %1460 = vmatprep.mubr.bf16.mxu0 0
        %1461 = vmatmul.mubr.bf16.gmra.mrb[0].mxu0 %v1423
        %v1462 = vpop.f32.mrb[0].mxu0
        %v1463 = vadd.f32 0.0, %v1462
        %v1464 = vpop.f32.mrb[0].mxu0
        %v1465 = vpop.f32.mrb[0].mxu0
        %v1466 = vpop.f32.mrb[0].mxu0
        %1467 = vdwg.mxu0
        %1468 = vset.pattern.permute.xlu0 0
        %1469 = vperm.xlu0 %1468, %v1234
        %v1470 = vpop.permute.xlu0 %1469
        %1472 = vset.pattern.permute.xlu0 0
        %1473 = vperm.xlu0 %1472, %v1239
        %v1474 = vpop.permute.xlu0 %1473
        %1476 = vset.pattern.permute.xlu0 0
        %1477 = vperm.xlu0 %1476, %v1241
        %v1478 = vpop.permute.xlu0 %1477
        %1480 = vset.pattern.permute.xlu0 0
        %1481 = vperm.xlu0 %1480, %v1243
        %v1482 = vpop.permute.xlu0 %1481
        %v1484 = vlaneseq
        %v1485 = vshrl.u32 %v1484, 7
        %v1486 = vsub.s32 0, %v1485
        %v1487 = vrot.slane %v1261, %v1486
        %v1488 = vlaneseq
        %v1489 = vshrl.u32 %v1488, 7
        %v1490 = vsub.s32 0, %v1489
        %v1491 = vrot.slane %v1278, %v1490
        %v1492 = vlaneseq
        %v1493 = vshrl.u32 %v1492, 7
        %v1494 = vsub.s32 0, %v1493
        %v1495 = vrot.slane %v1280, %v1494
        %v1496 = vlaneseq
        %v1497 = vshrl.u32 %v1496, 7
        %v1498 = vsub.s32 0, %v1497
        %v1499 = vrot.slane %v1282, %v1498
        %v1500 = vadd.f32 %v1470, %v1487
        %v1501 = vadd.f32 %v1474, %v1491
        %v1502 = vadd.f32 %v1478, %v1495
        %v1503 = vadd.f32 %v1482, %v1499
        %vm1504 = vcmp.eq.s32.totalorder %v1161, 1
        %v1505 = vsel %vm1504, %v1500, -1e+30
        %v1506 = vsel %vm1504, %v1501, -1e+30
        %v1507 = vsel %vm1504, %v1502, -1e+30
        %v1508 = vsel %vm1504, %v1503, -1e+30
        %v1509 = vsel %vm1163, %v1505, -inf
        %1510 = vmax.xlane.f32.xlu0 %v1509
        %v1511 = vpop.xlane.xlu0 %1510
        %v1512 = vsel %vm1163, %v1506, -inf
        %1513 = vmax.xlane.f32.xlu0 %v1512
        %v1514 = vpop.xlane.xlu0 %1513
        %v1515 = vsel %vm1163, %v1507, -inf
        %1516 = vmax.xlane.f32.xlu0 %v1515
        %v1517 = vpop.xlane.xlu0 %1516
        %v1518 = vsel %vm1163, %v1508, -inf
        %1519 = vmax.xlane.f32.xlu0 %v1518
        %v1520 = vpop.xlane.xlu0 %1519
        %v1521 = vsub.f32 -inf, %v1511
        %v1522 = vsub.f32 -inf, %v1514
        %v1523 = vsub.f32 -inf, %v1517
        %v1524 = vsub.f32 -inf, %v1520
        %v1525 = vmul.f32 %v1521, 1.442695
        %v1526 = vpow.pop %v1525
        %v1527 = vmul.f32 %v1522, 1.442695
        %v1528 = vpow.pop %v1527
        %v1529 = vmul.f32 %v1523, 1.442695
        %v1530 = vpow.pop %v1529
        %v1531 = vmul.f32 %v1524, 1.442695
        %v1532 = vpow.pop %v1531
        %v1533 = vsub.f32 %v1505, %v1511
        %v1534 = vsub.f32 %v1506, %v1514
        %v1535 = vsub.f32 %v1507, %v1517
        %v1536 = vsub.f32 %v1508, %v1520
        %v1537 = vmul.f32 %v1533, 1.442695
        %v1538 = vpow.pop %v1537
        %v1539 = vmul.f32 %v1534, 1.442695
        %v1540 = vpow.pop %v1539
        %v1541 = vmul.f32 %v1535, 1.442695
        %v1542 = vpow.pop %v1541
        %v1543 = vmul.f32 %v1536, 1.442695
        %v1544 = vpow.pop %v1543
        %v1545 = vmul.f32 %v1538, %v1325
        %v1546 = vmul.f32 %v1540, %v1371
        %v1547 = vmul.f32 %v1542, %v1417
        %v1548 = vmul.f32 %v1544, %v1463
        %v1549 = vmul.f32 %v1526, 0.0
        %v1550 = vmul.f32 %v1528, 0.0
        %v1551 = vmul.f32 %v1530, 0.0
        %v1552 = vmul.f32 %v1532, 0.0
        %v1553 = vsel %vm1163, %v1545, 0.0
        %1554 = vadd.xlane.f32.xlu0 %v1553
        %v1555 = vpop.xlane.xlu0 %1554
        %v1556 = vsel %vm1163, %v1546, 0.0
        %1557 = vadd.xlane.f32.xlu0 %v1556
        %v1558 = vpop.xlane.xlu0 %1557
        %v1559 = vsel %vm1163, %v1547, 0.0
        %1560 = vadd.xlane.f32.xlu0 %v1559
        %v1561 = vpop.xlane.xlu0 %1560
        %v1562 = vsel %vm1163, %v1548, 0.0
        %1563 = vadd.xlane.f32.xlu0 %v1562
        %v1564 = vpop.xlane.xlu0 %1563
        %v1565 = vadd.f32 %v1549, %v1555
        %v1566 = vadd.f32 %v1550, %v1558
        %v1567 = vadd.f32 %v1551, %v1561
        %v1568 = vadd.f32 %v1552, %v1564
        %v1569 = vpack.c.bf16 %v1545, %v1545
        %v1570 = vpack.c.bf16 %v1546, %v1546
        %v1571 = vpack.c.bf16 %v1547, %v1547
        %v1572 = vpack.c.bf16 %v1548, %v1548
        %v1574 = vsel %vm1163, %v1569, 0
        %vm1576 = vcmask 1043456
        %v1578 = vsel %vm1576, %v1148, 0
        %1580 = vmatprep.subr.bf16.mxu0 0
        %1581 = vmatpush1.bf16.msra.mxu0 %v1578
        %1582 = vmatprep.subr.bf16.mxu0 0
        %1583 = vmatpush1.bf16.msra.mxu0 0
        %1584 = vmatprep.subr.bf16.mxu0 0
        %1585 = vmatpush1.bf16.msra.mxu0 0
        %1586 = vmatprep.subr.bf16.mxu0 0
        %1587 = vmatpush1.bf16.msra.mxu0 0
        %1588 = vmatprep.subr.bf16.mxu0 0
        %1589 = vmatpush1.bf16.msra.mxu0 0
        %1590 = vmatprep.subr.bf16.mxu0 0
        %1591 = vmatpush1.bf16.msra.mxu0 0
        %1592 = vmatprep.subr.bf16.mxu0 0
        %1593 = vmatpush1.bf16.msra.mxu0 0
        %1594 = vmatprep.subr.bf16.mxu0 0
        %1595 = vmatpush1.bf16.msra.mxu0 0
        %1596 = vmatprep.subr.bf16.mxu0 0
        %1597 = vmatpush1.bf16.msra.mxu0 0
        %1598 = vmatprep.subr.bf16.mxu0 0
        %1599 = vmatpush1.bf16.msra.mxu0 0
        %1600 = vmatprep.subr.bf16.mxu0 0
        %1601 = vmatpush1.bf16.msra.mxu0 0
        %1602 = vmatprep.subr.bf16.mxu0 0
        %1603 = vmatpush1.bf16.msra.mxu0 0
        %1604 = vmatprep.subr.bf16.mxu0 0
        %1605 = vmatpush1.bf16.msra.mxu0 0
        %1606 = vmatprep.subr.bf16.mxu0 0
        %1607 = vmatpush1.bf16.msra.mxu0 0
        %1608 = vmatprep.subr.bf16.mxu0 0
        %1609 = vmatpush1.bf16.msra.mxu0 0
        %1610 = vmatprep.subr.bf16.mxu0 0
        %1611 = vmatpush1.bf16.msra.mxu0 0
        %1612 = vmatprep.mubr.bf16.mxu0 0
        %1613 = vmatmul.mubr.bf16.gmra.mrb[0].mxu0 %v1574
        %v1614 = vpop.f32.mrb[0].mxu0
        %v1615 = vadd.f32 0.0, %v1614
        %v1616 = vpop.f32.mrb[0].mxu0
        %v1617 = vpop.f32.mrb[0].mxu0
        %v1618 = vpop.f32.mrb[0].mxu0
        %1619 = vdwg.mxu0
        %v1621 = vsel %vm1163, %v1570, 0
        %v1624 = vsel %vm1576, %v1151, 0
        %1626 = vmatprep.subr.bf16.mxu0 0
        %1627 = vmatpush1.bf16.msra.mxu0 %v1624
        %1628 = vmatprep.subr.bf16.mxu0 0
        %1629 = vmatpush1.bf16.msra.mxu0 0
        %1630 = vmatprep.subr.bf16.mxu0 0
        %1631 = vmatpush1.bf16.msra.mxu0 0
        %1632 = vmatprep.subr.bf16.mxu0 0
        %1633 = vmatpush1.bf16.msra.mxu0 0
        %1634 = vmatprep.subr.bf16.mxu0 0
        %1635 = vmatpush1.bf16.msra.mxu0 0
        %1636 = vmatprep.subr.bf16.mxu0 0
        %1637 = vmatpush1.bf16.msra.mxu0 0
        %1638 = vmatprep.subr.bf16.mxu0 0
        %1639 = vmatpush1.bf16.msra.mxu0 0
        %1640 = vmatprep.subr.bf16.mxu0 0
        %1641 = vmatpush1.bf16.msra.mxu0 0
        %1642 = vmatprep.subr.bf16.mxu0 0
        %1643 = vmatpush1.bf16.msra.mxu0 0
        %1644 = vmatprep.subr.bf16.mxu0 0
        %1645 = vmatpush1.bf16.msra.mxu0 0
        %1646 = vmatprep.subr.bf16.mxu0 0
        %1647 = vmatpush1.bf16.msra.mxu0 0
        %1648 = vmatprep.subr.bf16.mxu0 0
        %1649 = vmatpush1.bf16.msra.mxu0 0
        %1650 = vmatprep.subr.bf16.mxu0 0
        %1651 = vmatpush1.bf16.msra.mxu0 0
        %1652 = vmatprep.subr.bf16.mxu0 0
        %1653 = vmatpush1.bf16.msra.mxu0 0
        %1654 = vmatprep.subr.bf16.mxu0 0
        %1655 = vmatpush1.bf16.msra.mxu0 0
        %1656 = vmatprep.subr.bf16.mxu0 0
        %1657 = vmatpush1.bf16.msra.mxu0 0
        %1658 = vmatprep.mubr.bf16.mxu0 0
        %1659 = vmatmul.mubr.bf16.gmra.mrb[0].mxu0 %v1621
        %v1660 = vpop.f32.mrb[0].mxu0
        %v1661 = vadd.f32 0.0, %v1660
        %v1662 = vpop.f32.mrb[0].mxu0
        %v1663 = vpop.f32.mrb[0].mxu0
        %v1664 = vpop.f32.mrb[0].mxu0
        %1665 = vdwg.mxu0
        %v1667 = vsel %vm1163, %v1571, 0
        %v1670 = vsel %vm1576, %v1153, 0
        %1672 = vmatprep.subr.bf16.mxu0 0
        %1673 = vmatpush1.bf16.msra.mxu0 %v1670
        %1674 = vmatprep.subr.bf16.mxu0 0
        %1675 = vmatpush1.bf16.msra.mxu0 0
        %1676 = vmatprep.subr.bf16.mxu0 0
        %1677 = vmatpush1.bf16.msra.mxu0 0
        %1678 = vmatprep.subr.bf16.mxu0 0
        %1679 = vmatpush1.bf16.msra.mxu0 0
        %1680 = vmatprep.subr.bf16.mxu0 0
        %1681 = vmatpush1.bf16.msra.mxu0 0
        %1682 = vmatprep.subr.bf16.mxu0 0
        %1683 = vmatpush1.bf16.msra.mxu0 0
        %1684 = vmatprep.subr.bf16.mxu0 0
        %1685 = vmatpush1.bf16.msra.mxu0 0
        %1686 = vmatprep.subr.bf16.mxu0 0
        %1687 = vmatpush1.bf16.msra.mxu0 0
        %1688 = vmatprep.subr.bf16.mxu0 0
        %1689 = vmatpush1.bf16.msra.mxu0 0
        %1690 = vmatprep.subr.bf16.mxu0 0
        %1691 = vmatpush1.bf16.msra.mxu0 0
        %1692 = vmatprep.subr.bf16.mxu0 0
        %1693 = vmatpush1.bf16.msra.mxu0 0
        %1694 = vmatprep.subr.bf16.mxu0 0
        %1695 = vmatpush1.bf16.msra.mxu0 0
        %1696 = vmatprep.subr.bf16.mxu0 0
        %1697 = vmatpush1.bf16.msra.mxu0 0
        %1698 = vmatprep.subr.bf16.mxu0 0
        %1699 = vmatpush1.bf16.msra.mxu0 0
        %1700 = vmatprep.subr.bf16.mxu0 0
        %1701 = vmatpush1.bf16.msra.mxu0 0
        %1702 = vmatprep.subr.bf16.mxu0 0
        %1703 = vmatpush1.bf16.msra.mxu0 0
        %1704 = vmatprep.mubr.bf16.mxu0 0
        %1705 = vmatmul.mubr.bf16.gmra.mrb[0].mxu0 %v1667
        %v1706 = vpop.f32.mrb[0].mxu0
        %v1707 = vadd.f32 0.0, %v1706
        %v1708 = vpop.f32.mrb[0].mxu0
        %v1709 = vpop.f32.mrb[0].mxu0
        %v1710 = vpop.f32.mrb[0].mxu0
        %1711 = vdwg.mxu0
        %v1713 = vsel %vm1163, %v1572, 0
        %v1716 = vsel %vm1576, %v1155, 0
        %1718 = vmatprep.subr.bf16.mxu0 0
        %1719 = vmatpush1.bf16.msra.mxu0 %v1716
        %1720 = vmatprep.subr.bf16.mxu0 0
        %1721 = vmatpush1.bf16.msra.mxu0 0
        %1722 = vmatprep.subr.bf16.mxu0 0
        %1723 = vmatpush1.bf16.msra.mxu0 0
        %1724 = vmatprep.subr.bf16.mxu0 0
        %1725 = vmatpush1.bf16.msra.mxu0 0
        %1726 = vmatprep.subr.bf16.mxu0 0
        %1727 = vmatpush1.bf16.msra.mxu0 0
        %1728 = vmatprep.subr.bf16.mxu0 0
        %1729 = vmatpush1.bf16.msra.mxu0 0
        %1730 = vmatprep.subr.bf16.mxu0 0
        %1731 = vmatpush1.bf16.msra.mxu0 0
        %1732 = vmatprep.subr.bf16.mxu0 0
        %1733 = vmatpush1.bf16.msra.mxu0 0
        %1734 = vmatprep.subr.bf16.mxu0 0
        %1735 = vmatpush1.bf16.msra.mxu0 0
        %1736 = vmatprep.subr.bf16.mxu0 0
        %1737 = vmatpush1.bf16.msra.mxu0 0
        %1738 = vmatprep.subr.bf16.mxu0 0
        %1739 = vmatpush1.bf16.msra.mxu0 0
        %1740 = vmatprep.subr.bf16.mxu0 0
        %1741 = vmatpush1.bf16.msra.mxu0 0
        %1742 = vmatprep.subr.bf16.mxu0 0
        %1743 = vmatpush1.bf16.msra.mxu0 0
        %1744 = vmatprep.subr.bf16.mxu0 0
        %1745 = vmatpush1.bf16.msra.mxu0 0
        %1746 = vmatprep.subr.bf16.mxu0 0
        %1747 = vmatpush1.bf16.msra.mxu0 0
        %1748 = vmatprep.subr.bf16.mxu0 0
        %1749 = vmatpush1.bf16.msra.mxu0 0
        %1750 = vmatprep.mubr.bf16.mxu0 0
        %1751 = vmatmul.mubr.bf16.gmra.mrb[0].mxu0 %v1713
        %v1752 = vpop.f32.mrb[0].mxu0
        %v1753 = vadd.f32 0.0, %v1752
        %v1754 = vpop.f32.mrb[0].mxu0
        %v1755 = vpop.f32.mrb[0].mxu0
        %v1756 = vpop.f32.mrb[0].mxu0
        %1757 = vdwg.mxu0
        %v1758 = vadd.f32 %v1549, %v1615
        %v1759 = vadd.f32 %v1550, %v1661
        %v1760 = vadd.f32 %v1551, %v1707
        %v1761 = vadd.f32 %v1552, %v1753
        %v1762 = vand.u32 2147483647, %v1565
        %v1763 = vand.u32 2147483647, %v1566
        %v1764 = vand.u32 2147483647, %v1567
        %v1765 = vand.u32 2147483647, %v1568
        %v1766 = vsub.f32 0.0, %v1511
        %v1767 = vsub.f32 0.0, %v1514
        %v1768 = vsub.f32 0.0, %v1517
        %v1769 = vsub.f32 0.0, %v1520
        %v1770 = vmul.f32 %v1766, 1.442695
        %v1771 = vpow.pop %v1770
        %v1772 = vmul.f32 %v1767, 1.442695
        %v1773 = vpow.pop %v1772
        %v1774 = vmul.f32 %v1768, 1.442695
        %v1775 = vpow.pop %v1774
        %v1776 = vmul.f32 %v1769, 1.442695
        %v1777 = vpow.pop %v1776
        %v1778 = vmax.f32 %v1762, %v1771
        %v1779 = vmax.f32 %v1763, %v1773
        %v1780 = vmax.f32 %v1764, %v1775
        %v1781 = vmax.f32 %v1765, %v1777
        %v1782 = vrcp.pop %v1778
        %v1783 = vrcp.pop %v1779
        %v1784 = vrcp.pop %v1780
        %v1785 = vrcp.pop %v1781
        %v1786 = vmul.f32 %v1758, %v1782
        %v1787 = vmul.f32 %v1759, %v1783
        %v1788 = vmul.f32 %v1760, %v1784
        %v1789 = vmul.f32 %v1761, %v1785
        %1791 = vrot.lane.b32.xlu0 %v1787, 8
        %v1792 = vpop.permute.xlu0 %1791
        %1795 = vrot.lane.b32.xlu0 %v1788, 16
        %v1796 = vpop.permute.xlu0 %1795
        %1799 = vrot.lane.b32.xlu0 %v1789, 24
        %v1800 = vpop.permute.xlu0 %1799
        %v1802 = vsel %vm1163, %v1786, %v1792
        %vm1803 = vcmask 130048
        %v1804 = vsel %vm1803, %v1802, %v1796
        %vm1805 = vcmask 195584
        %v1806 = vsel %vm1805, %v1804, %v1800
        %v1807 = vmul.f32 %v985, %v1806
        %v1808 = vpack.c.bf16 %v1807, %v1807
        %v1809 = vld [vmem:[%s710] sm:$0xf]
        %v1810 = vld [vmem:[%s710 + $0x4] sm:$0xf]
        %v1811 = vld [vmem:[%s710 + $0x8] sm:$0xf]
        %v1812 = vld [vmem:[%s710 + $0xc] sm:$0xf]
        %v1817 = vunpack.c.l.b16 %v1809
        %v1818 = vunpack.c.l.b16 %v1810
        %v1819 = vunpack.c.l.b16 %v1811
        %v1820 = vunpack.c.l.b16 %v1812
        %v1821 = vpack.c.b16 %v1818, %v1817
        %v1822 = vpack.c.b16 %v1820, %v1819
        %v1826 = vsel %vm720, %v1808, 0
        %1828 = vmatprep.subr.bf16.mxu0 0
        %1829 = vmatpush1.bf16.msra.mxu0 %v1821
        %1830 = vmatprep.subr.bf16.mxu0 0
        %1831 = vmatpush1.bf16.msra.mxu0 %v1822
        %1832 = vmatprep.subr.bf16.mxu0 0
        %1833 = vmatpush1.bf16.msra.mxu0 0
        %1834 = vmatprep.subr.bf16.mxu0 0
        %1835 = vmatpush1.bf16.msra.mxu0 0
        %1836 = vmatprep.subr.bf16.mxu0 0
        %1837 = vmatpush1.bf16.msra.mxu0 0
        %1838 = vmatprep.subr.bf16.mxu0 0
        %1839 = vmatpush1.bf16.msra.mxu0 0
        %1840 = vmatprep.subr.bf16.mxu0 0
        %1841 = vmatpush1.bf16.msra.mxu0 0
        %1842 = vmatprep.subr.bf16.mxu0 0
        %1843 = vmatpush1.bf16.msra.mxu0 0
        %1844 = vmatprep.subr.bf16.mxu0 0
        %1845 = vmatpush1.bf16.msra.mxu0 0
        %1846 = vmatprep.subr.bf16.mxu0 0
        %1847 = vmatpush1.bf16.msra.mxu0 0
        %1848 = vmatprep.subr.bf16.mxu0 0
        %1849 = vmatpush1.bf16.msra.mxu0 0
        %1850 = vmatprep.subr.bf16.mxu0 0
        %1851 = vmatpush1.bf16.msra.mxu0 0
        %1852 = vmatprep.subr.bf16.mxu0 0
        %1853 = vmatpush1.bf16.msra.mxu0 0
        %1854 = vmatprep.subr.bf16.mxu0 0
        %1855 = vmatpush1.bf16.msra.mxu0 0
        %1856 = vmatprep.subr.bf16.mxu0 0
        %1857 = vmatpush1.bf16.msra.mxu0 0
        %1858 = vmatprep.subr.bf16.mxu0 0
        %1859 = vmatpush1.bf16.msra.mxu0 0
        %1860 = vmatprep.mubr.bf16.mxu0 0
        %1861 = vmatmul.mubr.bf16.gmra.mrb[0].mxu0 %v1826
        %v1862 = vpop.f32.mrb[0].mxu0
        %v1863 = vadd.f32 0.0, %v1862
        %v1864 = vpop.f32.mrb[0].mxu0
        %v1865 = vpop.f32.mrb[0].mxu0
        %v1866 = vpop.f32.mrb[0].mxu0
        %1867 = vdwg.mxu0
        %v1868 = vadd.f32 %v719, %v1863
        %1869 = vst.msk [vmem:[#allocation2] sm:$0xff] %vm720, %v1868
        %p1870 = scmp.eq.s32.totalorder %s40, 1
        // Predicated region
        $region93: #{tpu_custom_call.1} parent=67 // pred_check
          %p1871 = pneg %p1870
        $region94: #{tpu_custom_call.1} parent=67 // pred_check_branch
          %1873 = sbr.rel (%p1871) target = $region96
        $region95: #{tpu_custom_call.1} parent=67 // pred_region
          %v1874 = vld [vmem:[%s556] sm:$0xff]
          %v1875 = vadd.f32 %v1868, %v1874
          %1876 = vst.msk [vmem:[%s679] sm:$0xff] %vm720, %v1875
        $region96: #{tpu_custom_call.1} parent=67 // pred_fallthru
          _
        %s1877 = sand.u32 %s367, 1
        %s1878 = scalar_lea.sflag [#allocation5], %s1877
        %s1879 = sand.u32 %s367, 1
        %s1880 = smul.addr %s1879, 8
        %s1881 = scalar_lea.vmem [#allocation12], %s1880
        // Predicated region
        $region97: #{tpu_custom_call.1} parent=67 // pred_check
          %p1882 = pneg %p377
        $region98: #{tpu_custom_call.1} parent=67 // pred_check_branch
          %1884 = sbr.rel (%p1882) target = $region100
        $region99: #{tpu_custom_call.1} parent=67 // pred_region
          %s1886 = ssub.s32 128, 128
          %1887 = vsyncadd %s1878, %s1886
          %s1888 = smul.addr %s39, 128
          %s1889 = scalar_lea.hbm %s12, %s1888
          %s1891 = sshll.u32 %s1881, 4
          %s1892 = int_to_ptr.vmem [resolvable:$true] %s1891
          %1894 = dma.vmem_to_hbm [thread:$0]  %s1892, 128, %s1889, %s1878
        $region100: #{tpu_custom_call.1} parent=67 // pred_fallthru
          _
      $region68: #{tpu_custom_call.1} parent=5 // pred_fallthru
        _
      %p1895 = scmp.le.s32.totalorder 2, %s30
      // Predicated region
      $region101: #{tpu_custom_call.1} parent=5 // pred_check
        %p1896 = pneg %p1895
      $region102: #{tpu_custom_call.1} parent=5 // pred_check_branch
        %1898 = sbr.rel (%p1896) target = $region104
      $region103: #{tpu_custom_call.1} parent=5 // pred_region
        %s1899 = ssub.s32 %s30, 2
        // Predicated region
        $region105: #{tpu_custom_call.1} parent=103 // pred_check
          %p1900 = pneg %p383
        $region106: #{tpu_custom_call.1} parent=103 // pred_check_branch
          %1902 = sbr.rel (%p1900) target = $region108
        $region107: #{tpu_custom_call.1} parent=103 // pred_region
          %s1903 = sand.u32 %s368, 1
          %s1904 = scalar_lea.sflag [#allocation5], %s1903
          %s1905 = sand.u32 %s368, 1
          %s1906 = smul.addr %s1905, 8
          %s1907 = scalar_lea.vmem [#allocation12], %s1906
          %1908 = dma.done %s1904, 128
        $region108: #{tpu_custom_call.1} parent=103 // pred_fallthru
          _
      $region104: #{tpu_custom_call.1} parent=5 // pred_fallthru
        _
    $region6: #{tpu_custom_call.1} parent=1 // loop_footer
      %s34 = sadd.s32 1, %s30
    $region7: #{tpu_custom_call.1} parent=1 // loop_footer_branch
      %29 = sbr.rel target = $region3
    $region8: #{tpu_custom_call.1} parent=1 // loop_exit
      _
    %1909 = vsyncpa [#allocation4], 1
    %s1910 = scalar_lea.sflag [#allocation4], 1
    %1911 = vsyncpa %s1910, 1
    %1912 = vsyncpa [#allocation7], 1
    %s1913 = scalar_lea.sflag [#allocation7], 1
    %1914 = vsyncpa %s1913, 1
    %1915 = vsyncpa [#allocation10], 1
    %s1916 = scalar_lea.sflag [#allocation10], 1
    %1917 = vsyncpa %s1916, 1
    %1918 = vsyncpa [#allocation5], 1
    %s1919 = scalar_lea.sflag [#allocation5], 1
    %1920 = vsyncpa %s1919, 1

</llo_original>
